<compile_context>
chip_gen: v7x
topology: tpu7x:2x2x1
jax: 0.10.0
libtpu: 0.0.40
codegen_flags: <defaults>
</compile_context>

<pallas_src>
import functools

import jax
import jax.numpy as jnp
from jax.experimental import pallas as pl
from jax.experimental.pallas import tpu as pltpu

T_ITERS = 3  # struc2vec message-passing iterations


def _policy_kernel(nfm_ref, adj_ref, reach_ref,
                   w1, b1, w2, b2, w3, b3, w4, b4,
                   w5a, w5b, b5, w6, b6, w7, b7,
                   logits_ref, norm_ref, *, t_iters, matmul_dtype):
    f32 = jnp.float32
    TB, N, F = nfm_ref.shape
    E = w1.shape[1]

    nfm = nfm_ref[...].reshape(TB * N, F)            # matmul_dtype, (TB*N, F)
    adj = adj_ref[...]                               # matmul_dtype, (TB, N, N)

    # ---- struc2vec node term (theta1): one tall flattened matmul ----
    s1 = jnp.dot(nfm, w1[...].astype(matmul_dtype),
                 preferred_element_type=f32) + b1[...]                # (TB*N, E)

    # ---- struc2vec edge term (theta3/theta4), binary-adjacency closed form ----
    #   sum_i relu(W[b,i,j]*w4 + b4) = deg_j*relu(w4+b4) + (N-deg_j)*relu(b4)
    # TODO(synk): weighted (non-0/1) adjacency needs the general per-edge relu path.
    deg = jnp.sum(adj.astype(f32), axis=1)[:, :, None]                # (TB, N, 1)
    r_on = jnp.maximum(w4[...] + b4[...], 0.0).reshape(1, 1, E)
    r_off = jnp.maximum(b4[...], 0.0).reshape(1, 1, E)
    s3_2 = (deg * r_on + (float(N) - deg) * r_off).reshape(TB * N, E)
    s3 = jnp.dot(s3_2.astype(matmul_dtype), w3[...].astype(matmul_dtype),
                 preferred_element_type=f32) + b3[...]                # (TB*N, E)

    # ---- message passing; first iteration unrolled (mu = 0 => theta2 term = b2) ----
    s_const = s1 + s3 + b2[...]                                       # (TB*N, E)
    mu = jnp.maximum(s_const, 0.0)
    w2_m = w2[...].astype(matmul_dtype)
    for _ in range(t_iters - 1):
        mu3 = mu.astype(matmul_dtype).reshape(TB, N, E)
        agg = jnp.einsum('bji,bie->bje', adj, mu3,
                         preferred_element_type=f32).reshape(TB * N, E)
        mu = jnp.maximum(
            jnp.dot(agg.astype(matmul_dtype), w2_m,
                    preferred_element_type=f32) + s_const, 0.0)

    # ---- policy head ----
    # Global branch: theta6 on the node-sum (tall 2-D matmul), folded against the
    # global half of theta5 -> one scalar per batch row.
    summu = jnp.sum(mu.reshape(TB, N, E), axis=1)                     # (TB, E)
    g = jnp.dot(summu.astype(matmul_dtype), w6[...].astype(matmul_dtype),
                preferred_element_type=f32) + b6[...]                 # (TB, E)
    g_term = jnp.sum(jnp.maximum(g, 0.0) * w5a[...],
                     axis=-1, keepdims=True)                          # (TB, 1)

    # Local branch: theta7 on flattened nodes, folded against the local half of theta5.
    loc = jnp.maximum(
        jnp.dot(mu.astype(matmul_dtype), w7[...].astype(matmul_dtype),
                preferred_element_type=f32) + b7[...], 0.0)           # (TB*N, E)
    loc_term = jnp.sum(loc.reshape(TB, N, E) * w5b[...].reshape(1, 1, E),
                       axis=-1)                                       # (TB, N)

    logits = loc_term + g_term + b5[...]                              # (TB, N)

    # Mask unreachable nodes; store lane/sublane-dense (TB, N) outputs.
    # TODO(synk): an all-masked row degenerates to a uniform distribution (same as the
    # PyTorch module); add an explicit guard upstream if that state is reachable.
    masked = jnp.where(reach_ref[...] != 0.0, logits,
                       jnp.full_like(logits, -1e20))
    logits_ref[...] = masked

    # Fused log_softmax == Categorical(logits=masked).logits
    m = jnp.max(masked, axis=-1, keepdims=True)
    ex = jnp.exp(masked - m)
    norm_ref[...] = masked - (m + jnp.log(jnp.sum(ex, axis=-1, keepdims=True)))


def _pick_batch_block(B, N, node_dim, E, vmem_budget_bytes=24 << 20):
    """Batch rows per grid step under a conservative per-step VMEM budget that fits
    every generation (v5e 16 MiB / v6e+v7x 32 MiB default scoped, v7x 64 MiB
    physical).  The pallas_call raises vmem_limit_bytes so this budget, not the
    default scoped limit, is the binding constraint."""
    per_row = (2 * (N * node_dim + N * N + N)   # double-buffered input blocks
               + 2 * 2 * N                      # two double-buffered (tb, N) outputs
               + 8 * N * E                      # resident f32 intermediates (s1/s3/mu/agg/loc/..)
               ) * 4
    tb = int(max(1, min(B, vmem_budget_bytes // max(per_row, 1))))
    # Keep >= 2 grid steps once the batch is big enough to split usefully so both
    # v7x TensorCores get work (batch axis is "parallel").
    if B >= 16 and pl.cdiv(B, tb) < 2:
        tb = pl.cdiv(B, 2)
    return tb


def policy_forward(X, params, actions=None, batch_block=None,
                   matmul_dtype=jnp.bfloat16):
    """Returns (prob_logits, normalized_logits [== Categorical(logits=...).logits],
    action_logprobs)."""
    if X.ndim == 2:
        X = X[None]
    X = X.astype(jnp.float32)
    B, N, D = X.shape
    node_dim = D - N - 1
    E = params['w1'].shape[1]

    # Host-side split of X (one fused XLA pass): no unaligned in-kernel lane slice of
    # the adjacency, and each operand gets its own clean DMA / dtype.
    nfm = X[:, :, :node_dim].astype(matmul_dtype)
    adj = X[:, :, node_dim:node_dim + N].astype(matmul_dtype)   # binary: exact in bf16
    reach = X[:, :, node_dim + N]                                # (B, N) f32 mask

    if batch_block is None:
        tb = _pick_batch_block(B, N, node_dim, E)
    else:
        tb = max(1, min(int(batch_block), B))
    G = pl.cdiv(B, tb)
    Bp = G * tb
    if Bp != B:                      # zero-pad awkward batch sizes instead of tb -> 1
        pad = Bp - B
        nfm = jnp.pad(nfm, ((0, pad), (0, 0), (0, 0)))
        adj = jnp.pad(adj, ((0, pad), (0, 0), (0, 0)))
        reach = jnp.pad(reach, ((0, pad), (0, 0)))

    # (G, tb, ...) layout: every BlockSpec's last two dims equal the full array dims,
    # so any tb is legal and the (tb, N) outputs stay sublane/lane dense.
    nfm_r = nfm.reshape(G, tb, N, node_dim)
    adj_r = adj.reshape(G, tb, N, N)
    reach_r = reach.reshape(G, tb, N)

    weight_keys = ('w1', 'b1', 'w2', 'b2', 'w3', 'b3', 'w4', 'b4',
                   'w5a', 'w5b', 'b5', 'w6', 'b6', 'w7', 'b7')
    weights = [params[k].astype(jnp.float32) for k in weight_keys]

    def const_spec(a):
        nd = a.ndim
        return pl.BlockSpec(a.shape, lambda i, _nd=nd: (0,) * _nd)

    in_specs = ([pl.BlockSpec((None, tb, N, node_dim), lambda i: (i, 0, 0, 0)),
                 pl.BlockSpec((None, tb, N, N), lambda i: (i, 0, 0, 0)),
                 pl.BlockSpec((None, tb, N), lambda i: (i, 0, 0))]
                + [const_spec(a) for a in weights])
    out_specs = (pl.BlockSpec((None, tb, N), lambda i: (i, 0, 0)),
                 pl.BlockSpec((None, tb, N), lambda i: (i, 0, 0)))
    out_shape = (jax.ShapeDtypeStruct((G, tb, N), jnp.float32),
                 jax.ShapeDtypeStruct((G, tb, N), jnp.float32))

    kernel = functools.partial(_policy_kernel, t_iters=T_ITERS,
                               matmul_dtype=matmul_dtype)

    logits_r, norm_r = pl.pallas_call(
        kernel,
        out_shape=out_shape,
        grid=(G,),
        in_specs=in_specs,
        out_specs=out_specs,
        compiler_params=pltpu.CompilerParams(
            dimension_semantics=("parallel",),      # batch blocks are independent
            vmem_limit_bytes=64 << 20),             # raise the 16/32 MiB default scoped limits
    )(nfm_r, adj_r, reach_r, *weights)

    prob_logits = logits_r.reshape(Bp, N)[:B]                        # (B, N)
    norm_logits = norm_r.reshape(Bp, N)[:B]                          # (B, N)

    if actions is None:
        action_probs = None
    else:
        action_probs = jnp.take_along_axis(
            norm_logits, actions[:, None].astype(jnp.int32), axis=1)  # (B, 1)
    # TODO(synk): torch.distributions.Categorical has no Pallas equivalent; we return
    # its defining (normalized) logits instead.
    return prob_logits, norm_logits, action_probs


def _reference_forward(X, params, matmul_dtype=jnp.bfloat16):
    """Pure-JAX reference mirroring the module (general per-edge relu edge term) with
    the same MXU-operand casts as the kernel."""
    f32 = jnp.float32
    B, N, D = X.shape
    node_dim = D - 1 - N
    E = params['w1'].shape[1]
    md = lambda a: a.astype(matmul_dtype)

    nfm = X[:, :, :node_dim]
    W = X[:, :, node_dim:node_dim + N]
    reach = X[:, :, node_dim + N]

    s1 = jnp.einsum('bnf,fe->bne', md(nfm), md(params['w1']),
                    preferred_element_type=f32) + params['b1']
    edge = jax.nn.relu(W[..., None] * params['w4'].reshape(1, 1, 1, E)
                       + params['b4'].reshape(1, 1, 1, E))
    s3 = jnp.einsum('bne,ef->bnf', md(edge.sum(axis=1)), md(params['w3']),
                    preferred_element_type=f32) + params['b3']
    mu = jnp.zeros((B, N, E), f32)
    for _ in range(T_ITERS):
        agg = jnp.einsum('bji,bie->bje', md(W), md(mu), preferred_element_type=f32)
        mu = jax.nn.relu(s1 + jnp.einsum('bne,ef->bnf', md(agg), md(params['w2']),
                                         preferred_element_type=f32)
                         + params['b2'] + s3)
    glob = jnp.dot(md(mu.sum(axis=1)), md(params['w6']),
                   preferred_element_type=f32) + params['b6']          # (B, E)
    loc = jax.nn.relu(jnp.einsum('bne,ef->bnf', md(mu), md(params['w7']),
                                 preferred_element_type=f32) + params['b7'])
    g_term = (jax.nn.relu(glob) * params['w5a']).sum(-1, keepdims=True)   # (B, 1)
    loc_term = (loc * params['w5b'].reshape(1, 1, E)).sum(-1)             # (B, N)
    logits = loc_term + g_term + params['b5'][0, 0]
    logits = jnp.where(reach != 0.0, logits, -1e20)
    return logits, jax.nn.log_softmax(logits, axis=-1)


if __name__ == "__main__":
    key = jax.random.PRNGKey(0)
    B, N, node_dim, E = 5, 8, 5, 32
    keys = jax.random.split(key, 12)

    # Build X = [nfm | W | reachable]
    nfm = jax.random.normal(keys[0], (B, N, node_dim), jnp.float32)
    adj = (jax.random.uniform(keys[1], (B, N, N)) > 0.5).astype(jnp.float32)
    adj = jnp.maximum(adj, jnp.transpose(adj, (0, 2, 1)))        # symmetric binary adjacency
    reach = (jax.random.uniform(keys[2], (B, N)) > 0.3).astype(jnp.float32)
    reach = reach.at[:, 0].set(1.0)                              # at least one reachable node
    X = jnp.concatenate([nfm, adj, reach[:, :, None]], axis=2)   # (B, N, node_dim + N + 1)

    def init_linear(k, fan_in, fan_out):
        kw, kb = jax.random.split(k)
        w = jax.random.normal(kw, (fan_in, fan_out), jnp.float32) * 0.1
        b = jax.random.normal(kb, (1, fan_out), jnp.float32) * 0.1
        return w, b

    w1, b1 = init_linear(keys[3], node_dim, E)   # struc2vec.theta1
    w2, b2 = init_linear(keys[4], E, E)          # struc2vec.theta2
    w3, b3 = init_linear(keys[5], E, E)          # struc2vec.theta3
    w4, b4 = init_linear(keys[6], 1, E)          # struc2vec.theta4 (stored as (1, E))
    w5, b5 = init_linear(keys[7], 2 * E, 1)      # theta5_pi  ((2E, 1) column)
    w6, b6 = init_linear(keys[8], E, E)          # theta6_pi
    w7, b7 = init_linear(keys[9], E, E)          # theta7_pi

    params = dict(w1=w1, b1=b1, w2=w2, b2=b2, w3=w3, b3=b3, w4=w4, b4=b4,
                  w5a=w5[:E].T, w5b=w5[E:].T, b5=b5,   # (1, E) rows of theta5
                  w6=w6, b6=b6, w7=w7, b7=b7)

    actions = jnp.array([0, 3, 1, 7, 2], dtype=jnp.int32)

    ref_logits, ref_norm = _reference_forward(X, params)
    ref_ap = jnp.take_along_axis(ref_norm, actions[:, None], axis=1)

    # Default tiling (single grid step at this tiny batch).
    pl1, nl1, ap1 = policy_forward(X, params, actions)
    # Explicit small block: exercises a multi-step grid + batch zero-padding.
    pl2, nl2, ap2 = policy_forward(X, params, actions, batch_block=2)
    jax.block_until_ready((pl1, nl1, ap1, pl2, nl2, ap2))

    for got_l, got_n, got_a in ((pl1, nl1, ap1), (pl2, nl2, ap2)):
        assert jnp.allclose(got_l, ref_logits, rtol=1e-2, atol=1e-2)
        assert jnp.allclose(got_n, ref_norm, rtol=1e-2, atol=1e-2)
        assert jnp.allclose(got_a, ref_ap, rtol=1e-2, atol=1e-2)
    print("KERNEL_OK")
</pallas_src>

<mosaic_0001>
module attributes {stable_mosaic.version = 11 : i64} {
  func.func @_policy_kernel(%arg0: i32, %arg1: memref<1x5x8x5xbf16, #tpu.memory_space<vmem>>, %arg2: memref<1x5x8x8xbf16, #tpu.memory_space<vmem>>, %arg3: memref<1x5x8xf32, #tpu.memory_space<vmem>>, %arg4: memref<5x32xf32, #tpu.memory_space<vmem>>, %arg5: memref<1x32xf32, #tpu.memory_space<vmem>>, %arg6: memref<32x32xf32, #tpu.memory_space<vmem>>, %arg7: memref<1x32xf32, #tpu.memory_space<vmem>>, %arg8: memref<32x32xf32, #tpu.memory_space<vmem>>, %arg9: memref<1x32xf32, #tpu.memory_space<vmem>>, %arg10: memref<1x32xf32, #tpu.memory_space<vmem>>, %arg11: memref<1x32xf32, #tpu.memory_space<vmem>>, %arg12: memref<1x32xf32, #tpu.memory_space<vmem>>, %arg13: memref<1x32xf32, #tpu.memory_space<vmem>>, %arg14: memref<1x1xf32, #tpu.memory_space<vmem>>, %arg15: memref<32x32xf32, #tpu.memory_space<vmem>>, %arg16: memref<1x32xf32, #tpu.memory_space<vmem>>, %arg17: memref<32x32xf32, #tpu.memory_space<vmem>>, %arg18: memref<1x32xf32, #tpu.memory_space<vmem>>, %arg19: memref<1x5x8xf32, #tpu.memory_space<vmem>>, %arg20: memref<1x5x8xf32, #tpu.memory_space<vmem>>) attributes {dimension_semantics = [#tpu.dimension_semantics<parallel>], iteration_bounds = array<i64: 1>, scalar_prefetch = 0 : i64, scratch_operands = 0 : i64, tpu.core_type = #tpu.core_type<tc>, window_params = [{transform_indices = @transform_0, window_bounds = array<i64: 1, 5, 8, 5>}, {transform_indices = @transform_1, window_bounds = array<i64: 1, 5, 8, 8>}, {transform_indices = @transform_2, window_bounds = array<i64: 1, 5, 8>}, {pipeline_mode = #tpu.pipeline_mode<synchronous>, transform_indices = @transform_3, window_bounds = array<i64: 5, 32>}, {pipeline_mode = #tpu.pipeline_mode<synchronous>, transform_indices = @transform_4, window_bounds = array<i64: 1, 32>}, {pipeline_mode = #tpu.pipeline_mode<synchronous>, transform_indices = @transform_5, window_bounds = array<i64: 32, 32>}, {pipeline_mode = #tpu.pipeline_mode<synchronous>, transform_indices = @transform_6, window_bounds = array<i64: 1, 32>}, {pipeline_mode = #tpu.pipeline_mode<synchronous>, transform_indices = @transform_7, window_bounds = array<i64: 32, 32>}, {pipeline_mode = #tpu.pipeline_mode<synchronous>, transform_indices = @transform_8, window_bounds = array<i64: 1, 32>}, {pipeline_mode = #tpu.pipeline_mode<synchronous>, transform_indices = @transform_9, window_bounds = array<i64: 1, 32>}, {pipeline_mode = #tpu.pipeline_mode<synchronous>, transform_indices = @transform_10, window_bounds = array<i64: 1, 32>}, {pipeline_mode = #tpu.pipeline_mode<synchronous>, transform_indices = @transform_11, window_bounds = array<i64: 1, 32>}, {pipeline_mode = #tpu.pipeline_mode<synchronous>, transform_indices = @transform_12, window_bounds = array<i64: 1, 32>}, {pipeline_mode = #tpu.pipeline_mode<synchronous>, transform_indices = @transform_13, window_bounds = array<i64: 1, 1>}, {pipeline_mode = #tpu.pipeline_mode<synchronous>, transform_indices = @transform_14, window_bounds = array<i64: 32, 32>}, {pipeline_mode = #tpu.pipeline_mode<synchronous>, transform_indices = @transform_15, window_bounds = array<i64: 1, 32>}, {pipeline_mode = #tpu.pipeline_mode<synchronous>, transform_indices = @transform_16, window_bounds = array<i64: 32, 32>}, {pipeline_mode = #tpu.pipeline_mode<synchronous>, transform_indices = @transform_17, window_bounds = array<i64: 1, 32>}, {transform_indices = @transform_18, window_bounds = array<i64: 1, 5, 8>}, {transform_indices = @transform_19, window_bounds = array<i64: 1, 5, 8>}]} {
    %c0 = arith.constant 0 : index
    %c0_0 = arith.constant 0 : index
    %c0_1 = arith.constant 0 : index
    %c0_2 = arith.constant 0 : index
    %0 = vector.load %arg1[%c0, %c0_0, %c0_1, %c0_2] : memref<1x5x8x5xbf16, #tpu.memory_space<vmem>>, vector<1x5x8x5xbf16>
    %1 = vector.shape_cast %0 : vector<1x5x8x5xbf16> to vector<5x8x5xbf16>
    %2 = vector.shape_cast %1 : vector<5x8x5xbf16> to vector<40x5xbf16>
    %c0_3 = arith.constant 0 : index
    %c0_4 = arith.constant 0 : index
    %c0_5 = arith.constant 0 : index
    %c0_6 = arith.constant 0 : index
    %3 = vector.load %arg2[%c0_3, %c0_4, %c0_5, %c0_6] : memref<1x5x8x8xbf16, #tpu.memory_space<vmem>>, vector<1x5x8x8xbf16>
    %4 = vector.shape_cast %3 : vector<1x5x8x8xbf16> to vector<5x8x8xbf16>
    %c0_7 = arith.constant 0 : index
    %c0_8 = arith.constant 0 : index
    %5 = vector.load %arg4[%c0_7, %c0_8] : memref<5x32xf32, #tpu.memory_space<vmem>>, vector<5x32xf32>
    %6 = arith.truncf %5 : vector<5x32xf32> to vector<5x32xbf16>
    %cst = arith.constant dense<0.000000e+00> : vector<40x32xf32>
    %7 = tpu.matmul %2, %6, %cst {dimension_numbers = #tpu.dot_dimension_numbers<[1], [0], [0], [1], [0, 0, 1, 1], [], []>} : vector<40x5xbf16>, vector<5x32xbf16>, vector<40x32xf32> -> vector<40x32xf32>
    %c0_9 = arith.constant 0 : index
    %c0_10 = arith.constant 0 : index
    %8 = vector.load %arg5[%c0_9, %c0_10] : memref<1x32xf32, #tpu.memory_space<vmem>>, vector<1x32xf32>
    %9 = vector.broadcast %8 : vector<1x32xf32> to vector<40x32xf32>
    %10 = arith.addf %7, %9 : vector<40x32xf32>
    %11 = arith.extf %4 : vector<5x8x8xbf16> to vector<5x8x8xf32>
    %cst_11 = arith.constant dense<0.000000e+00> : vector<5x8xf32>
    %12 = vector.multi_reduction <add>, %11, %cst_11 [1] : vector<5x8x8xf32> to vector<5x8xf32>
    %13 = vector.shape_cast %12 : vector<5x8xf32> to vector<5x8x1xf32>
    %c0_12 = arith.constant 0 : index
    %c0_13 = arith.constant 0 : index
    %14 = vector.load %arg10[%c0_12, %c0_13] : memref<1x32xf32, #tpu.memory_space<vmem>>, vector<1x32xf32>
    %c0_14 = arith.constant 0 : index
    %c0_15 = arith.constant 0 : index
    %15 = vector.load %arg11[%c0_14, %c0_15] : memref<1x32xf32, #tpu.memory_space<vmem>>, vector<1x32xf32>
    %16 = arith.addf %14, %15 : vector<1x32xf32>
    %cst_16 = arith.constant 0.000000e+00 : f32
    %17 = vector.broadcast %cst_16 : f32 to vector<1x32xf32>
    %18 = arith.maximumf %16, %17 : vector<1x32xf32>
    %19 = vector.shape_cast %18 : vector<1x32xf32> to vector<1x1x32xf32>
    %c0_17 = arith.constant 0 : index
    %c0_18 = arith.constant 0 : index
    %20 = vector.load %arg11[%c0_17, %c0_18] : memref<1x32xf32, #tpu.memory_space<vmem>>, vector<1x32xf32>
    %cst_19 = arith.constant 0.000000e+00 : f32
    %21 = vector.broadcast %cst_19 : f32 to vector<1x32xf32>
    %22 = arith.maximumf %20, %21 : vector<1x32xf32>
    %23 = vector.shape_cast %22 : vector<1x32xf32> to vector<1x1x32xf32>
    %24 = vector.broadcast %13 : vector<5x8x1xf32> to vector<5x8x32xf32>
    %25 = vector.broadcast %19 : vector<1x1x32xf32> to vector<5x8x32xf32>
    %26 = arith.mulf %24, %25 : vector<5x8x32xf32>
    %cst_20 = arith.constant 8.000000e+00 : f32
    %27 = vector.broadcast %cst_20 : f32 to vector<5x8x1xf32>
    %28 = arith.subf %27, %13 : vector<5x8x1xf32>
    %29 = vector.broadcast %28 : vector<5x8x1xf32> to vector<5x8x32xf32>
    %30 = vector.broadcast %23 : vector<1x1x32xf32> to vector<5x8x32xf32>
    %31 = arith.mulf %29, %30 : vector<5x8x32xf32>
    %32 = arith.addf %26, %31 : vector<5x8x32xf32>
    %33 = vector.shape_cast %32 : vector<5x8x32xf32> to vector<40x32xf32>
    %34 = arith.truncf %33 : vector<40x32xf32> to vector<40x32xbf16>
    %c0_21 = arith.constant 0 : index
    %c0_22 = arith.constant 0 : index
    %35 = vector.load %arg8[%c0_21, %c0_22] : memref<32x32xf32, #tpu.memory_space<vmem>>, vector<32x32xf32>
    %36 = arith.truncf %35 : vector<32x32xf32> to vector<32x32xbf16>
    %cst_23 = arith.constant dense<0.000000e+00> : vector<40x32xf32>
    %37 = tpu.matmul %34, %36, %cst_23 {dimension_numbers = #tpu.dot_dimension_numbers<[1], [0], [0], [1], [0, 0, 1, 1], [], []>} : vector<40x32xbf16>, vector<32x32xbf16>, vector<40x32xf32> -> vector<40x32xf32>
    %c0_24 = arith.constant 0 : index
    %c0_25 = arith.constant 0 : index
    %38 = vector.load %arg9[%c0_24, %c0_25] : memref<1x32xf32, #tpu.memory_space<vmem>>, vector<1x32xf32>
    %39 = vector.broadcast %38 : vector<1x32xf32> to vector<40x32xf32>
    %40 = arith.addf %37, %39 : vector<40x32xf32>
    %41 = arith.addf %10, %40 : vector<40x32xf32>
    %c0_26 = arith.constant 0 : index
    %c0_27 = arith.constant 0 : index
    %42 = vector.load %arg7[%c0_26, %c0_27] : memref<1x32xf32, #tpu.memory_space<vmem>>, vector<1x32xf32>
    %43 = vector.broadcast %42 : vector<1x32xf32> to vector<40x32xf32>
    %44 = arith.addf %41, %43 : vector<40x32xf32>
    %cst_28 = arith.constant 0.000000e+00 : f32
    %45 = vector.broadcast %cst_28 : f32 to vector<40x32xf32>
    %46 = arith.maximumf %44, %45 : vector<40x32xf32>
    %c0_29 = arith.constant 0 : index
    %c0_30 = arith.constant 0 : index
    %47 = vector.load %arg6[%c0_29, %c0_30] : memref<32x32xf32, #tpu.memory_space<vmem>>, vector<32x32xf32>
    %48 = arith.truncf %47 : vector<32x32xf32> to vector<32x32xbf16>
    %49 = arith.truncf %46 : vector<40x32xf32> to vector<40x32xbf16>
    %50 = vector.shape_cast %49 : vector<40x32xbf16> to vector<5x8x32xbf16>
    "tpu.trace_start"() <{level = 10 : i32, message = "bji,bie->bje"}> : () -> ()
    %cst_31 = arith.constant dense<0.000000e+00> : vector<5x8x32xf32>
    %51 = tpu.matmul %4, %50, %cst_31 {dimension_numbers = #tpu.dot_dimension_numbers<[2], [1], [1], [2], [0, 0, 0, 1, 1, 2], [0], [0]>} : vector<5x8x8xbf16>, vector<5x8x32xbf16>, vector<5x8x32xf32> -> vector<5x8x32xf32>
    "tpu.trace_stop"() : () -> ()
    %52 = vector.shape_cast %51 : vector<5x8x32xf32> to vector<40x32xf32>
    %53 = arith.truncf %52 : vector<40x32xf32> to vector<40x32xbf16>
    %cst_32 = arith.constant dense<0.000000e+00> : vector<40x32xf32>
    %54 = tpu.matmul %53, %48, %cst_32 {dimension_numbers = #tpu.dot_dimension_numbers<[1], [0], [0], [1], [0, 0, 1, 1], [], []>} : vector<40x32xbf16>, vector<32x32xbf16>, vector<40x32xf32> -> vector<40x32xf32>
    %55 = arith.addf %54, %44 : vector<40x32xf32>
    %cst_33 = arith.constant 0.000000e+00 : f32
    %56 = vector.broadcast %cst_33 : f32 to vector<40x32xf32>
    %57 = arith.maximumf %55, %56 : vector<40x32xf32>
    %58 = arith.truncf %57 : vector<40x32xf32> to vector<40x32xbf16>
    %59 = vector.shape_cast %58 : vector<40x32xbf16> to vector<5x8x32xbf16>
    "tpu.trace_start"() <{level = 10 : i32, message = "bji,bie->bje"}> : () -> ()
    %cst_34 = arith.constant dense<0.000000e+00> : vector<5x8x32xf32>
    %60 = tpu.matmul %4, %59, %cst_34 {dimension_numbers = #tpu.dot_dimension_numbers<[2], [1], [1], [2], [0, 0, 0, 1, 1, 2], [0], [0]>} : vector<5x8x8xbf16>, vector<5x8x32xbf16>, vector<5x8x32xf32> -> vector<5x8x32xf32>
    "tpu.trace_stop"() : () -> ()
    %61 = vector.shape_cast %60 : vector<5x8x32xf32> to vector<40x32xf32>
    %62 = arith.truncf %61 : vector<40x32xf32> to vector<40x32xbf16>
    %cst_35 = arith.constant dense<0.000000e+00> : vector<40x32xf32>
    %63 = tpu.matmul %62, %48, %cst_35 {dimension_numbers = #tpu.dot_dimension_numbers<[1], [0], [0], [1], [0, 0, 1, 1], [], []>} : vector<40x32xbf16>, vector<32x32xbf16>, vector<40x32xf32> -> vector<40x32xf32>
    %64 = arith.addf %63, %44 : vector<40x32xf32>
    %cst_36 = arith.constant 0.000000e+00 : f32
    %65 = vector.broadcast %cst_36 : f32 to vector<40x32xf32>
    %66 = arith.maximumf %64, %65 : vector<40x32xf32>
    %67 = vector.shape_cast %66 : vector<40x32xf32> to vector<5x8x32xf32>
    %cst_37 = arith.constant dense<0.000000e+00> : vector<5x32xf32>
    %68 = vector.multi_reduction <add>, %67, %cst_37 [1] : vector<5x8x32xf32> to vector<5x32xf32>
    %69 = arith.truncf %68 : vector<5x32xf32> to vector<5x32xbf16>
    %c0_38 = arith.constant 0 : index
    %c0_39 = arith.constant 0 : index
    %70 = vector.load %arg15[%c0_38, %c0_39] : memref<32x32xf32, #tpu.memory_space<vmem>>, vector<32x32xf32>
    %71 = arith.truncf %70 : vector<32x32xf32> to vector<32x32xbf16>
    %cst_40 = arith.constant dense<0.000000e+00> : vector<5x32xf32>
    %72 = tpu.matmul %69, %71, %cst_40 {dimension_numbers = #tpu.dot_dimension_numbers<[1], [0], [0], [1], [0, 0, 1, 1], [], []>} : vector<5x32xbf16>, vector<32x32xbf16>, vector<5x32xf32> -> vector<5x32xf32>
    %c0_41 = arith.constant 0 : index
    %c0_42 = arith.constant 0 : index
    %73 = vector.load %arg16[%c0_41, %c0_42] : memref<1x32xf32, #tpu.memory_space<vmem>>, vector<1x32xf32>
    %74 = vector.broadcast %73 : vector<1x32xf32> to vector<5x32xf32>
    %75 = arith.addf %72, %74 : vector<5x32xf32>
    %cst_43 = arith.constant 0.000000e+00 : f32
    %76 = vector.broadcast %cst_43 : f32 to vector<5x32xf32>
    %77 = arith.maximumf %75, %76 : vector<5x32xf32>
    %c0_44 = arith.constant 0 : index
    %c0_45 = arith.constant 0 : index
    %78 = vector.load %arg12[%c0_44, %c0_45] : memref<1x32xf32, #tpu.memory_space<vmem>>, vector<1x32xf32>
    %79 = vector.broadcast %78 : vector<1x32xf32> to vector<5x32xf32>
    %80 = arith.mulf %77, %79 : vector<5x32xf32>
    %cst_46 = arith.constant dense<0.000000e+00> : vector<5xf32>
    %81 = vector.multi_reduction <add>, %80, %cst_46 [1] : vector<5x32xf32> to vector<5xf32>
    %82 = vector.shape_cast %81 : vector<5xf32> to vector<5x1xf32>
    %83 = arith.truncf %66 : vector<40x32xf32> to vector<40x32xbf16>
    %c0_47 = arith.constant 0 : index
    %c0_48 = arith.constant 0 : index
    %84 = vector.load %arg17[%c0_47, %c0_48] : memref<32x32xf32, #tpu.memory_space<vmem>>, vector<32x32xf32>
    %85 = arith.truncf %84 : vector<32x32xf32> to vector<32x32xbf16>
    %cst_49 = arith.constant dense<0.000000e+00> : vector<40x32xf32>
    %86 = tpu.matmul %83, %85, %cst_49 {dimension_numbers = #tpu.dot_dimension_numbers<[1], [0], [0], [1], [0, 0, 1, 1], [], []>} : vector<40x32xbf16>, vector<32x32xbf16>, vector<40x32xf32> -> vector<40x32xf32>
    %c0_50 = arith.constant 0 : index
    %c0_51 = arith.constant 0 : index
    %87 = vector.load %arg18[%c0_50, %c0_51] : memref<1x32xf32, #tpu.memory_space<vmem>>, vector<1x32xf32>
    %88 = vector.broadcast %87 : vector<1x32xf32> to vector<40x32xf32>
    %89 = arith.addf %86, %88 : vector<40x32xf32>
    %cst_52 = arith.constant 0.000000e+00 : f32
    %90 = vector.broadcast %cst_52 : f32 to vector<40x32xf32>
    %91 = arith.maximumf %89, %90 : vector<40x32xf32>
    %92 = vector.shape_cast %91 : vector<40x32xf32> to vector<5x8x32xf32>
    %c0_53 = arith.constant 0 : index
    %c0_54 = arith.constant 0 : index
    %93 = vector.load %arg13[%c0_53, %c0_54] : memref<1x32xf32, #tpu.memory_space<vmem>>, vector<1x32xf32>
    %94 = vector.shape_cast %93 : vector<1x32xf32> to vector<1x1x32xf32>
    %95 = vector.broadcast %94 : vector<1x1x32xf32> to vector<5x8x32xf32>
    %96 = arith.mulf %92, %95 : vector<5x8x32xf32>
    %cst_55 = arith.constant dense<0.000000e+00> : vector<5x8xf32>
    %97 = vector.multi_reduction <add>, %96, %cst_55 [2] : vector<5x8x32xf32> to vector<5x8xf32>
    %98 = vector.broadcast %82 : vector<5x1xf32> to vector<5x8xf32>
    %99 = arith.addf %97, %98 : vector<5x8xf32>
    %c0_56 = arith.constant 0 : index
    %c0_57 = arith.constant 0 : index
    %100 = vector.load %arg14[%c0_56, %c0_57] : memref<1x1xf32, #tpu.memory_space<vmem>>, vector<1x1xf32>
    %101 = vector.broadcast %100 : vector<1x1xf32> to vector<5x8xf32>
    %102 = arith.addf %99, %101 : vector<5x8xf32>
    %c0_58 = arith.constant 0 : index
    %c0_59 = arith.constant 0 : index
    %c0_60 = arith.constant 0 : index
    %103 = vector.load %arg3[%c0_58, %c0_59, %c0_60] : memref<1x5x8xf32, #tpu.memory_space<vmem>>, vector<1x5x8xf32>
    %104 = vector.shape_cast %103 : vector<1x5x8xf32> to vector<5x8xf32>
    %cst_61 = arith.constant 0.000000e+00 : f32
    %105 = vector.broadcast %cst_61 : f32 to vector<5x8xf32>
    %106 = arith.cmpf one, %104, %105 : vector<5x8xf32>
    %cst_62 = arith.constant -1.000000e+20 : f32
    %107 = vector.broadcast %cst_62 : f32 to vector<5x8xf32>
    %108 = arith.select %106, %102, %107 : vector<5x8xi1>, vector<5x8xf32>
    %c0_63 = arith.constant 0 : index
    %c0_64 = arith.constant 0 : index
    %c0_65 = arith.constant 0 : index
    %109 = vector.load %arg19[%c0_63, %c0_64, %c0_65] : memref<1x5x8xf32, #tpu.memory_space<vmem>>, vector<1x5x8xf32>
    %110 = vector.shape_cast %109 : vector<1x5x8xf32> to vector<5x8xf32>
    %111 = vector.shape_cast %108 : vector<5x8xf32> to vector<1x5x8xf32>
    tpu.vector_store %arg19[%c0_63, %c0_64, %c0_65], %111 {strides = array<i32>} : memref<1x5x8xf32, #tpu.memory_space<vmem>>, vector<1x5x8xf32>,
    %cst_66 = arith.constant dense<0xFF800000> : vector<5xf32>
    %112 = vector.multi_reduction <maximumf>, %108, %cst_66 [1] : vector<5x8xf32> to vector<5xf32>
    %113 = vector.shape_cast %112 : vector<5xf32> to vector<5x1xf32>
    %114 = vector.broadcast %113 : vector<5x1xf32> to vector<5x8xf32>
    %115 = arith.subf %108, %114 : vector<5x8xf32>
    %116 = math.exp %115 : vector<5x8xf32>
    %cst_67 = arith.constant dense<0.000000e+00> : vector<5xf32>
    %117 = vector.multi_reduction <add>, %116, %cst_67 [1] : vector<5x8xf32> to vector<5xf32>
    %118 = vector.shape_cast %117 : vector<5xf32> to vector<5x1xf32>
    %119 = math.log %118 : vector<5x1xf32>
    %120 = arith.addf %113, %119 : vector<5x1xf32>
    %121 = vector.broadcast %120 : vector<5x1xf32> to vector<5x8xf32>
    %122 = arith.subf %108, %121 : vector<5x8xf32>
    %c0_68 = arith.constant 0 : index
    %c0_69 = arith.constant 0 : index
    %c0_70 = arith.constant 0 : index
    %123 = vector.load %arg20[%c0_68, %c0_69, %c0_70] : memref<1x5x8xf32, #tpu.memory_space<vmem>>, vector<1x5x8xf32>
    %124 = vector.shape_cast %123 : vector<1x5x8xf32> to vector<5x8xf32>
    %125 = vector.shape_cast %122 : vector<5x8xf32> to vector<1x5x8xf32>
    tpu.vector_store %arg20[%c0_68, %c0_69, %c0_70], %125 {strides = array<i32>} : memref<1x5x8xf32, #tpu.memory_space<vmem>>, vector<1x5x8xf32>,
    return
  }
  func.func @transform_0(%arg0: i32) -> (i32, i32, i32, i32) {
    %c0_i32 = arith.constant 0 : i32
    %c0_i32_0 = arith.constant 0 : i32
    %c0_i32_1 = arith.constant 0 : i32
    %c0_i32_2 = arith.constant 0 : i32
    return %arg0, %c0_i32, %c0_i32_0, %c0_i32_1 : i32, i32, i32, i32
  }
  func.func @transform_1(%arg0: i32) -> (i32, i32, i32, i32) {
    %c0_i32 = arith.constant 0 : i32
    %c0_i32_0 = arith.constant 0 : i32
    %c0_i32_1 = arith.constant 0 : i32
    %c0_i32_2 = arith.constant 0 : i32
    return %arg0, %c0_i32, %c0_i32_0, %c0_i32_1 : i32, i32, i32, i32
  }
  func.func @transform_2(%arg0: i32) -> (i32, i32, i32) {
    %c0_i32 = arith.constant 0 : i32
    %c0_i32_0 = arith.constant 0 : i32
    %c0_i32_1 = arith.constant 0 : i32
    return %arg0, %c0_i32, %c0_i32_0 : i32, i32, i32
  }
  func.func @transform_3(%arg0: i32) -> (i32, i32) {
    %c0_i32 = arith.constant 0 : i32
    %c0_i32_0 = arith.constant 0 : i32
    %c0_i32_1 = arith.constant 0 : i32
    return %c0_i32, %c0_i32_0 : i32, i32
  }
  func.func @transform_4(%arg0: i32) -> (i32, i32) {
    %c0_i32 = arith.constant 0 : i32
    %c0_i32_0 = arith.constant 0 : i32
    %c0_i32_1 = arith.constant 0 : i32
    return %c0_i32, %c0_i32_0 : i32, i32
  }
  func.func @transform_5(%arg0: i32) -> (i32, i32) {
    %c0_i32 = arith.constant 0 : i32
    %c0_i32_0 = arith.constant 0 : i32
    %c0_i32_1 = arith.constant 0 : i32
    return %c0_i32, %c0_i32_0 : i32, i32
  }
  func.func @transform_6(%arg0: i32) -> (i32, i32) {
    %c0_i32 = arith.constant 0 : i32
    %c0_i32_0 = arith.constant 0 : i32
    %c0_i32_1 = arith.constant 0 : i32
    return %c0_i32, %c0_i32_0 : i32, i32
  }
  func.func @transform_7(%arg0: i32) -> (i32, i32) {
    %c0_i32 = arith.constant 0 : i32
    %c0_i32_0 = arith.constant 0 : i32
    %c0_i32_1 = arith.constant 0 : i32
    return %c0_i32, %c0_i32_0 : i32, i32
  }
  func.func @transform_8(%arg0: i32) -> (i32, i32) {
    %c0_i32 = arith.constant 0 : i32
    %c0_i32_0 = arith.constant 0 : i32
    %c0_i32_1 = arith.constant 0 : i32
    return %c0_i32, %c0_i32_0 : i32, i32
  }
  func.func @transform_9(%arg0: i32) -> (i32, i32) {
    %c0_i32 = arith.constant 0 : i32
    %c0_i32_0 = arith.constant 0 : i32
    %c0_i32_1 = arith.constant 0 : i32
    return %c0_i32, %c0_i32_0 : i32, i32
  }
  func.func @transform_10(%arg0: i32) -> (i32, i32) {
    %c0_i32 = arith.constant 0 : i32
    %c0_i32_0 = arith.constant 0 : i32
    %c0_i32_1 = arith.constant 0 : i32
    return %c0_i32, %c0_i32_0 : i32, i32
  }
  func.func @transform_11(%arg0: i32) -> (i32, i32) {
    %c0_i32 = arith.constant 0 : i32
    %c0_i32_0 = arith.constant 0 : i32
    %c0_i32_1 = arith.constant 0 : i32
    return %c0_i32, %c0_i32_0 : i32, i32
  }
  func.func @transform_12(%arg0: i32) -> (i32, i32) {
    %c0_i32 = arith.constant 0 : i32
    %c0_i32_0 = arith.constant 0 : i32
    %c0_i32_1 = arith.constant 0 : i32
    return %c0_i32, %c0_i32_0 : i32, i32
  }
  func.func @transform_13(%arg0: i32) -> (i32, i32) {
    %c0_i32 = arith.constant 0 : i32
    %c0_i32_0 = arith.constant 0 : i32
    %c0_i32_1 = arith.constant 0 : i32
    return %c0_i32, %c0_i32_0 : i32, i32
  }
  func.func @transform_14(%arg0: i32) -> (i32, i32) {
    %c0_i32 = arith.constant 0 : i32
    %c0_i32_0 = arith.constant 0 : i32
    %c0_i32_1 = arith.constant 0 : i32
    return %c0_i32, %c0_i32_0 : i32, i32
  }
  func.func @transform_15(%arg0: i32) -> (i32, i32) {
    %c0_i32 = arith.constant 0 : i32
    %c0_i32_0 = arith.constant 0 : i32
    %c0_i32_1 = arith.constant 0 : i32
    return %c0_i32, %c0_i32_0 : i32, i32
  }
  func.func @transform_16(%arg0: i32) -> (i32, i32) {
    %c0_i32 = arith.constant 0 : i32
    %c0_i32_0 = arith.constant 0 : i32
    %c0_i32_1 = arith.constant 0 : i32
    return %c0_i32, %c0_i32_0 : i32, i32
  }
  func.func @transform_17(%arg0: i32) -> (i32, i32) {
    %c0_i32 = arith.constant 0 : i32
    %c0_i32_0 = arith.constant 0 : i32
    %c0_i32_1 = arith.constant 0 : i32
    return %c0_i32, %c0_i32_0 : i32, i32
  }
  func.func @transform_18(%arg0: i32) -> (i32, i32, i32) {
    %c0_i32 = arith.constant 0 : i32
    %c0_i32_0 = arith.constant 0 : i32
    %c0_i32_1 = arith.constant 0 : i32
    return %arg0, %c0_i32, %c0_i32_0 : i32, i32, i32
  }
  func.func @transform_19(%arg0: i32) -> (i32, i32, i32) {
    %c0_i32 = arith.constant 0 : i32
    %c0_i32_0 = arith.constant 0 : i32
    %c0_i32_1 = arith.constant 0 : i32
    return %arg0, %c0_i32, %c0_i32_0 : i32, i32, i32
  }
}

</mosaic_0001>

<llo_original>
// kernel: tpu_custom_call.1
$region0: #{tpu_custom_call.1}
  #allocation0 [shape = 'u32[]', space=smem, size = 0x4, offset = 0x4, fixed_abs, tag = 'smem constant byte address 0x4 - core index']
  #allocation1 [shape = 'u32[144,128]{1,0:T(1,128)}', space=vmem, size = 0x12000, scoped, tag = 'internal scratch']
  #allocation2 [shape = 'f32[1,1]{1,0:T(1,128)S(1)}', space=vmem, size = 0x200, scoped, tag = 'scoped memory for tpu_custom_call.1']
  %s0 = inlined_call_operand.hbm [shape: bf16[1,5,8,5], index: 0, kind: input, shape index: {}]
  %s1 = inlined_call_operand.hbm [shape: bf16[1,5,8,8], index: 1, kind: input, shape index: {}]
  %s2 = inlined_call_operand.hbm [shape: f32[1,5,8], index: 2, kind: input, shape index: {}]
  %s3 = inlined_call_operand.hbm [shape: f32[5,32], index: 3, kind: input, shape index: {}]
  %s4 = inlined_call_operand.hbm [shape: f32[1,32], index: 4, kind: input, shape index: {}]
  %s5 = inlined_call_operand.hbm [shape: f32[32,32], index: 5, kind: input, shape index: {}]
  %s6 = inlined_call_operand.hbm [shape: f32[1,32], index: 6, kind: input, shape index: {}]
  %s7 = inlined_call_operand.hbm [shape: f32[32,32], index: 7, kind: input, shape index: {}]
  %s8 = inlined_call_operand.hbm [shape: f32[1,32], index: 8, kind: input, shape index: {}]
  %s9 = inlined_call_operand.hbm [shape: f32[1,32], index: 9, kind: input, shape index: {}]
  %s10 = inlined_call_operand.hbm [shape: f32[1,32], index: 10, kind: input, shape index: {}]
  %s11 = inlined_call_operand.hbm [shape: f32[1,32], index: 11, kind: input, shape index: {}]
  %s12 = inlined_call_operand.hbm [shape: f32[1,32], index: 12, kind: input, shape index: {}]
  %s13 = inlined_call_operand.<no memory space> [shape: f32[1,1], index: 13, kind: input, shape index: {}]
  %s14 = inlined_call_operand.hbm [shape: f32[32,32], index: 14, kind: input, shape index: {}]
  %s15 = inlined_call_operand.hbm [shape: f32[1,32], index: 15, kind: input, shape index: {}]
  %s16 = inlined_call_operand.hbm [shape: f32[32,32], index: 16, kind: input, shape index: {}]
  %s17 = inlined_call_operand.hbm [shape: f32[1,32], index: 17, kind: input, shape index: {}]
  %s18 = inlined_call_operand.hbm [shape: f32[1,5,8], index: 18, kind: output, shape index: {0}]
  %s19 = inlined_call_operand.hbm [shape: f32[1,5,8], index: 19, kind: output, shape index: {1}]
  %20 = xla_tuple %s18, %s19
  %s21 = sld [smem:[#allocation0]]
  $region158: #{tpu_custom_call.1} parent=0
    _
  %s23 = ssub.s32 1, %s21
  %s24 = scalar_select 0, %s23, %s21
  %v25 = vstv %s13
  %26 = vst [vmem:[#allocation2] sm:$0x1] %v25
  $region1: #{tpu_custom_call.1} parent=0
    #allocation3 [shape = 'u8[10240]{0}', space=vmem, size = 0x2800, scoped, tag = 'input window, operand 0, single buffered']
    #allocation4 [shape = 's32[1]{0}', space=sflag, size = 0x4, scoped, tag = 'scoped memory for tpu_custom_call.1']
    #allocation5 [shape = 's32[1]{0}', space=sflag, size = 0x4, scoped, tag = 'scoped memory for tpu_custom_call.1']
    #allocation6 [shape = 'u8[10240]{0}', space=vmem, size = 0x2800, scoped, tag = 'input window, operand 1, single buffered']
    #allocation7 [shape = 's32[1]{0}', space=sflag, size = 0x4, scoped, tag = 'scoped memory for tpu_custom_call.1']
    #allocation8 [shape = 'u8[4096]{0}', space=vmem, size = 0x1000, scoped, tag = 'input window, operand 2, single buffered']
    #allocation9 [shape = 'u8[4096]{0}', space=vmem, size = 0x1000, scoped, tag = 'input window, operand 3, single buffered']
    #allocation10 [shape = 's32[1]{0}', space=sflag, size = 0x4, scoped, tag = 'scoped memory for tpu_custom_call.1']
    #allocation11 [shape = 'u8[512]{0}', space=vmem, size = 0x400, scoped, tag = 'input window, operand 4, single buffered']
    #allocation12 [shape = 'u8[16384]{0}', space=vmem, size = 0x4000, scoped, tag = 'input window, operand 5, single buffered']
    #allocation13 [shape = 's32[1]{0}', space=sflag, size = 0x4, scoped, tag = 'scoped memory for tpu_custom_call.1']
    #allocation14 [shape = 'u8[512]{0}', space=vmem, size = 0x400, scoped, tag = 'input window, operand 6, single buffered']
    #allocation15 [shape = 'u8[16384]{0}', space=vmem, size = 0x4000, scoped, tag = 'input window, operand 7, single buffered']
    #allocation16 [shape = 's32[1]{0}', space=sflag, size = 0x4, scoped, tag = 'scoped memory for tpu_custom_call.1']
    #allocation17 [shape = 'u8[512]{0}', space=vmem, size = 0x400, scoped, tag = 'input window, operand 8, single buffered']
    #allocation18 [shape = 'u8[512]{0}', space=vmem, size = 0x400, scoped, tag = 'input window, operand 9, single buffered']
    #allocation19 [shape = 's32[1]{0}', space=sflag, size = 0x4, scoped, tag = 'scoped memory for tpu_custom_call.1']
    #allocation20 [shape = 'u8[512]{0}', space=vmem, size = 0x400, scoped, tag = 'input window, operand 10, single buffered']
    #allocation21 [shape = 'u8[512]{0}', space=vmem, size = 0x400, scoped, tag = 'input window, operand 11, single buffered']
    #allocation22 [shape = 's32[1]{0}', space=sflag, size = 0x4, scoped, tag = 'scoped memory for tpu_custom_call.1']
    #allocation23 [shape = 'u8[512]{0}', space=vmem, size = 0x400, scoped, tag = 'input window, operand 12, single buffered']
    #allocation24 [shape = 'u8[16384]{0}', space=vmem, size = 0x4000, scoped, tag = 'input window, operand 14, single buffered']
    #allocation25 [shape = 's32[1]{0}', space=sflag, size = 0x4, scoped, tag = 'scoped memory for tpu_custom_call.1']
    #allocation26 [shape = 'u8[512]{0}', space=vmem, size = 0x400, scoped, tag = 'input window, operand 15, single buffered']
    #allocation27 [shape = 'u8[16384]{0}', space=vmem, size = 0x4000, scoped, tag = 'input window, operand 16, single buffered']
    #allocation28 [shape = 's32[1]{0}', space=sflag, size = 0x4, scoped, tag = 'scoped memory for tpu_custom_call.1']
    #allocation29 [shape = 'u8[512]{0}', space=vmem, size = 0x400, scoped, tag = 'input window, operand 17, single buffered']
    #allocation30 [shape = 'u8[4096]{0}', space=vmem, size = 0x1000, scoped, tag = 'output window, operand 0, single buffered']
    #allocation31 [shape = 'u8[4096]{0}', space=vmem, size = 0x1000, scoped, tag = 'output window, operand 1, single buffered']
    #allocation32 [shape = 's32[1]{0}', space=sflag, size = 0x4, scoped, tag = 'scoped memory for tpu_custom_call.1']
    %27 = vsyncpa [#allocation4], 0
    %28 = vsyncpa [#allocation7], 0
    %29 = vsyncpa [#allocation10], 0
    %30 = vsyncpa [#allocation13], 0
    %31 = vsyncpa [#allocation16], 0
    %32 = vsyncpa [#allocation19], 0
    %33 = vsyncpa [#allocation22], 0
    %34 = vsyncpa [#allocation25], 0
    %35 = vsyncpa [#allocation28], 0
    %36 = vsyncpa [#allocation5], 0
    %37 = vsyncpa [#allocation32], 0
    // Predicated region
    $region2: #{tpu_custom_call.1} parent=1 // pred_check
      _
    $region3: #{tpu_custom_call.1} parent=1 // pred_check_branch
      %39 = sbr.rel (0) target = $region5
    $region4: #{tpu_custom_call.1} parent=1 // pred_region
      %s41 = ssub.s32 320, 320
      %42 = vsyncadd [#allocation4], %s41
      %s43 = sshll.u32 [#allocation3], 4
      %s44 = int_to_ptr.vmem [resolvable:$true] %s43
      %49 = dma.hbm_to_vmem [thread:$0]  %s0, 320, %s44, [#allocation4], 64, 64, 4
    $region5: #{tpu_custom_call.1} parent=1 // pred_fallthru
      _
    // Predicated region
    $region6: #{tpu_custom_call.1} parent=1 // pred_check
      _
    $region7: #{tpu_custom_call.1} parent=1 // pred_check_branch
      %51 = sbr.rel (0) target = $region9
    $region8: #{tpu_custom_call.1} parent=1 // pred_region
      %s53 = ssub.s32 320, 320
      %54 = vsyncadd [#allocation7], %s53
      %s55 = sshll.u32 [#allocation6], 4
      %s56 = int_to_ptr.vmem [resolvable:$true] %s55
      %61 = dma.hbm_to_vmem [thread:$0]  %s1, 320, %s56, [#allocation7], 64, 64, 4
    $region9: #{tpu_custom_call.1} parent=1 // pred_fallthru
      _
    // Predicated region
    $region10: #{tpu_custom_call.1} parent=1 // pred_check
      _
    $region11: #{tpu_custom_call.1} parent=1 // pred_check_branch
      %63 = sbr.rel (0) target = $region13
    $region12: #{tpu_custom_call.1} parent=1 // pred_region
      %s65 = ssub.s32 128, 128
      %66 = vsyncadd [#allocation7], %s65
      %s68 = sshll.u32 [#allocation8], 4
      %s69 = int_to_ptr.vmem [resolvable:$true] %s68
      %71 = dma.hbm_to_vmem [thread:$0]  %s2, 128, %s69, [#allocation7]
    $region13: #{tpu_custom_call.1} parent=1 // pred_fallthru
      _
    // Predicated region
    $region14: #{tpu_custom_call.1} parent=1 // pred_check
      _
    $region15: #{tpu_custom_call.1} parent=1 // pred_check_branch
      %73 = sbr.rel (0) target = $region17
    $region16: #{tpu_custom_call.1} parent=1 // pred_region
      %s75 = ssub.s32 128, 128
      %76 = vsyncadd [#allocation10], %s75
      %s78 = sshll.u32 [#allocation9], 4
      %s79 = int_to_ptr.vmem [resolvable:$true] %s78
      %81 = dma.hbm_to_vmem [thread:$0]  %s3, 128, %s79, [#allocation10]
    $region17: #{tpu_custom_call.1} parent=1 // pred_fallthru
      _
    // Predicated region
    $region18: #{tpu_custom_call.1} parent=1 // pred_check
      _
    $region19: #{tpu_custom_call.1} parent=1 // pred_check_branch
      %83 = sbr.rel (0) target = $region21
    $region20: #{tpu_custom_call.1} parent=1 // pred_region
      %s85 = ssub.s32 16, 16
      %86 = vsyncadd [#allocation10], %s85
      %s88 = sshll.u32 [#allocation11], 4
      %s89 = int_to_ptr.vmem [resolvable:$true] %s88
      %91 = dma.hbm_to_vmem [thread:$0]  %s4, 16, %s89, [#allocation10]
    $region21: #{tpu_custom_call.1} parent=1 // pred_fallthru
      _
    // Predicated region
    $region22: #{tpu_custom_call.1} parent=1 // pred_check
      _
    $region23: #{tpu_custom_call.1} parent=1 // pred_check_branch
      %93 = sbr.rel (0) target = $region25
    $region24: #{tpu_custom_call.1} parent=1 // pred_region
      %s95 = ssub.s32 512, 512
      %96 = vsyncadd [#allocation13], %s95
      %s97 = sshll.u32 [#allocation12], 4
      %s98 = int_to_ptr.vmem [resolvable:$true] %s97
      %103 = dma.hbm_to_vmem [thread:$0]  %s5, 512, %s98, [#allocation13], 128, 128, 8
    $region25: #{tpu_custom_call.1} parent=1 // pred_fallthru
      _
    // Predicated region
    $region26: #{tpu_custom_call.1} parent=1 // pred_check
      _
    $region27: #{tpu_custom_call.1} parent=1 // pred_check_branch
      %105 = sbr.rel (0) target = $region29
    $region28: #{tpu_custom_call.1} parent=1 // pred_region
      %s107 = ssub.s32 16, 16
      %108 = vsyncadd [#allocation13], %s107
      %s110 = sshll.u32 [#allocation14], 4
      %s111 = int_to_ptr.vmem [resolvable:$true] %s110
      %113 = dma.hbm_to_vmem [thread:$0]  %s6, 16, %s111, [#allocation13]
    $region29: #{tpu_custom_call.1} parent=1 // pred_fallthru
      _
    // Predicated region
    $region30: #{tpu_custom_call.1} parent=1 // pred_check
      _
    $region31: #{tpu_custom_call.1} parent=1 // pred_check_branch
      %115 = sbr.rel (0) target = $region33
    $region32: #{tpu_custom_call.1} parent=1 // pred_region
      %s117 = ssub.s32 512, 512
      %118 = vsyncadd [#allocation16], %s117
      %s119 = sshll.u32 [#allocation15], 4
      %s120 = int_to_ptr.vmem [resolvable:$true] %s119
      %125 = dma.hbm_to_vmem [thread:$0]  %s7, 512, %s120, [#allocation16], 128, 128, 8
    $region33: #{tpu_custom_call.1} parent=1 // pred_fallthru
      _
    // Predicated region
    $region34: #{tpu_custom_call.1} parent=1 // pred_check
      _
    $region35: #{tpu_custom_call.1} parent=1 // pred_check_branch
      %127 = sbr.rel (0) target = $region37
    $region36: #{tpu_custom_call.1} parent=1 // pred_region
      %s129 = ssub.s32 16, 16
      %130 = vsyncadd [#allocation16], %s129
      %s132 = sshll.u32 [#allocation17], 4
      %s133 = int_to_ptr.vmem [resolvable:$true] %s132
      %135 = dma.hbm_to_vmem [thread:$0]  %s8, 16, %s133, [#allocation16]
    $region37: #{tpu_custom_call.1} parent=1 // pred_fallthru
      _
    // Predicated region
    $region38: #{tpu_custom_call.1} parent=1 // pred_check
      _
    $region39: #{tpu_custom_call.1} parent=1 // pred_check_branch
      %137 = sbr.rel (0) target = $region41
    $region40: #{tpu_custom_call.1} parent=1 // pred_region
      %s139 = ssub.s32 16, 16
      %140 = vsyncadd [#allocation19], %s139
      %s142 = sshll.u32 [#allocation18], 4
      %s143 = int_to_ptr.vmem [resolvable:$true] %s142
      %145 = dma.hbm_to_vmem [thread:$0]  %s9, 16, %s143, [#allocation19]
    $region41: #{tpu_custom_call.1} parent=1 // pred_fallthru
      _
    // Predicated region
    $region42: #{tpu_custom_call.1} parent=1 // pred_check
      _
    $region43: #{tpu_custom_call.1} parent=1 // pred_check_branch
      %147 = sbr.rel (0) target = $region45
    $region44: #{tpu_custom_call.1} parent=1 // pred_region
      %s149 = ssub.s32 16, 16
      %150 = vsyncadd [#allocation19], %s149
      %s152 = sshll.u32 [#allocation20], 4
      %s153 = int_to_ptr.vmem [resolvable:$true] %s152
      %155 = dma.hbm_to_vmem [thread:$0]  %s10, 16, %s153, [#allocation19]
    $region45: #{tpu_custom_call.1} parent=1 // pred_fallthru
      _
    // Predicated region
    $region46: #{tpu_custom_call.1} parent=1 // pred_check
      _
    $region47: #{tpu_custom_call.1} parent=1 // pred_check_branch
      %157 = sbr.rel (0) target = $region49
    $region48: #{tpu_custom_call.1} parent=1 // pred_region
      %s159 = ssub.s32 16, 16
      %160 = vsyncadd [#allocation22], %s159
      %s162 = sshll.u32 [#allocation21], 4
      %s163 = int_to_ptr.vmem [resolvable:$true] %s162
      %165 = dma.hbm_to_vmem [thread:$0]  %s11, 16, %s163, [#allocation22]
    $region49: #{tpu_custom_call.1} parent=1 // pred_fallthru
      _
    // Predicated region
    $region50: #{tpu_custom_call.1} parent=1 // pred_check
      _
    $region51: #{tpu_custom_call.1} parent=1 // pred_check_branch
      %167 = sbr.rel (0) target = $region53
    $region52: #{tpu_custom_call.1} parent=1 // pred_region
      %s169 = ssub.s32 16, 16
      %170 = vsyncadd [#allocation22], %s169
      %s172 = sshll.u32 [#allocation23], 4
      %s173 = int_to_ptr.vmem [resolvable:$true] %s172
      %175 = dma.hbm_to_vmem [thread:$0]  %s12, 16, %s173, [#allocation22]
    $region53: #{tpu_custom_call.1} parent=1 // pred_fallthru
      _
    // Predicated region
    $region54: #{tpu_custom_call.1} parent=1 // pred_check
      _
    $region55: #{tpu_custom_call.1} parent=1 // pred_check_branch
      %177 = sbr.rel (0) target = $region57
    $region56: #{tpu_custom_call.1} parent=1 // pred_region
      _
    $region57: #{tpu_custom_call.1} parent=1 // pred_fallthru
      _
    // Predicated region
    $region58: #{tpu_custom_call.1} parent=1 // pred_check
      _
    $region59: #{tpu_custom_call.1} parent=1 // pred_check_branch
      %179 = sbr.rel (0) target = $region61
    $region60: #{tpu_custom_call.1} parent=1 // pred_region
      %s181 = ssub.s32 512, 512
      %182 = vsyncadd [#allocation25], %s181
      %s183 = sshll.u32 [#allocation24], 4
      %s184 = int_to_ptr.vmem [resolvable:$true] %s183
      %189 = dma.hbm_to_vmem [thread:$0]  %s14, 512, %s184, [#allocation25], 128, 128, 8
    $region61: #{tpu_custom_call.1} parent=1 // pred_fallthru
      _
    // Predicated region
    $region62: #{tpu_custom_call.1} parent=1 // pred_check
      _
    $region63: #{tpu_custom_call.1} parent=1 // pred_check_branch
      %191 = sbr.rel (0) target = $region65
    $region64: #{tpu_custom_call.1} parent=1 // pred_region
      %s193 = ssub.s32 16, 16
      %194 = vsyncadd [#allocation25], %s193
      %s196 = sshll.u32 [#allocation26], 4
      %s197 = int_to_ptr.vmem [resolvable:$true] %s196
      %199 = dma.hbm_to_vmem [thread:$0]  %s15, 16, %s197, [#allocation25]
    $region65: #{tpu_custom_call.1} parent=1 // pred_fallthru
      _
    // Predicated region
    $region66: #{tpu_custom_call.1} parent=1 // pred_check
      _
    $region67: #{tpu_custom_call.1} parent=1 // pred_check_branch
      %201 = sbr.rel (0) target = $region69
    $region68: #{tpu_custom_call.1} parent=1 // pred_region
      %s203 = ssub.s32 512, 512
      %204 = vsyncadd [#allocation28], %s203
      %s205 = sshll.u32 [#allocation27], 4
      %s206 = int_to_ptr.vmem [resolvable:$true] %s205
      %211 = dma.hbm_to_vmem [thread:$0]  %s16, 512, %s206, [#allocation28], 128, 128, 8
    $region69: #{tpu_custom_call.1} parent=1 // pred_fallthru
      _
    // Predicated region
    $region70: #{tpu_custom_call.1} parent=1 // pred_check
      _
    $region71: #{tpu_custom_call.1} parent=1 // pred_check_branch
      %213 = sbr.rel (0) target = $region73
    $region72: #{tpu_custom_call.1} parent=1 // pred_region
      %s215 = ssub.s32 16, 16
      %216 = vsyncadd [#allocation28], %s215
      %s218 = sshll.u32 [#allocation29], 4
      %s219 = int_to_ptr.vmem [resolvable:$true] %s218
      %221 = dma.hbm_to_vmem [thread:$0]  %s17, 16, %s219, [#allocation28]
    $region73: #{tpu_custom_call.1} parent=1 // pred_fallthru
      _
    // Predicated region
    $region74: #{tpu_custom_call.1} parent=1 // pred_check
      _
    $region75: #{tpu_custom_call.1} parent=1 // pred_check_branch
      %223 = sbr.rel (0) target = $region77
    $region76: #{tpu_custom_call.1} parent=1 // pred_region
      %224 = dma.done [#allocation4], 320
    $region77: #{tpu_custom_call.1} parent=1 // pred_fallthru
      _
    // Predicated region
    $region78: #{tpu_custom_call.1} parent=1 // pred_check
      _
    $region79: #{tpu_custom_call.1} parent=1 // pred_check_branch
      %226 = sbr.rel (0) target = $region81
    $region80: #{tpu_custom_call.1} parent=1 // pred_region
      %227 = dma.done [#allocation7], 320
    $region81: #{tpu_custom_call.1} parent=1 // pred_fallthru
      _
    // Predicated region
    $region82: #{tpu_custom_call.1} parent=1 // pred_check
      _
    $region83: #{tpu_custom_call.1} parent=1 // pred_check_branch
      %229 = sbr.rel (0) target = $region85
    $region84: #{tpu_custom_call.1} parent=1 // pred_region
      %230 = dma.done [#allocation7], 128
    $region85: #{tpu_custom_call.1} parent=1 // pred_fallthru
      _
    // Predicated region
    $region86: #{tpu_custom_call.1} parent=1 // pred_check
      _
    $region87: #{tpu_custom_call.1} parent=1 // pred_check_branch
      %232 = sbr.rel (0) target = $region89
    $region88: #{tpu_custom_call.1} parent=1 // pred_region
      %233 = dma.done [#allocation10], 128
    $region89: #{tpu_custom_call.1} parent=1 // pred_fallthru
      _
    // Predicated region
    $region90: #{tpu_custom_call.1} parent=1 // pred_check
      _
    $region91: #{tpu_custom_call.1} parent=1 // pred_check_branch
      %235 = sbr.rel (0) target = $region93
    $region92: #{tpu_custom_call.1} parent=1 // pred_region
      %236 = dma.done [#allocation10], 16
    $region93: #{tpu_custom_call.1} parent=1 // pred_fallthru
      _
    // Predicated region
    $region94: #{tpu_custom_call.1} parent=1 // pred_check
      _
    $region95: #{tpu_custom_call.1} parent=1 // pred_check_branch
      %238 = sbr.rel (0) target = $region97
    $region96: #{tpu_custom_call.1} parent=1 // pred_region
      %239 = dma.done [#allocation13], 512
    $region97: #{tpu_custom_call.1} parent=1 // pred_fallthru
      _
    // Predicated region
    $region98: #{tpu_custom_call.1} parent=1 // pred_check
      _
    $region99: #{tpu_custom_call.1} parent=1 // pred_check_branch
      %241 = sbr.rel (0) target = $region101
    $region100: #{tpu_custom_call.1} parent=1 // pred_region
      %242 = dma.done [#allocation13], 16
    $region101: #{tpu_custom_call.1} parent=1 // pred_fallthru
      _
    // Predicated region
    $region102: #{tpu_custom_call.1} parent=1 // pred_check
      _
    $region103: #{tpu_custom_call.1} parent=1 // pred_check_branch
      %244 = sbr.rel (0) target = $region105
    $region104: #{tpu_custom_call.1} parent=1 // pred_region
      %245 = dma.done [#allocation16], 512
    $region105: #{tpu_custom_call.1} parent=1 // pred_fallthru
      _
    // Predicated region
    $region106: #{tpu_custom_call.1} parent=1 // pred_check
      _
    $region107: #{tpu_custom_call.1} parent=1 // pred_check_branch
      %247 = sbr.rel (0) target = $region109
    $region108: #{tpu_custom_call.1} parent=1 // pred_region
      %248 = dma.done [#allocation16], 16
    $region109: #{tpu_custom_call.1} parent=1 // pred_fallthru
      _
    // Predicated region
    $region110: #{tpu_custom_call.1} parent=1 // pred_check
      _
    $region111: #{tpu_custom_call.1} parent=1 // pred_check_branch
      %250 = sbr.rel (0) target = $region113
    $region112: #{tpu_custom_call.1} parent=1 // pred_region
      %251 = dma.done [#allocation19], 16
    $region113: #{tpu_custom_call.1} parent=1 // pred_fallthru
      _
    // Predicated region
    $region114: #{tpu_custom_call.1} parent=1 // pred_check
      _
    $region115: #{tpu_custom_call.1} parent=1 // pred_check_branch
      %253 = sbr.rel (0) target = $region117
    $region116: #{tpu_custom_call.1} parent=1 // pred_region
      %254 = dma.done [#allocation19], 16
    $region117: #{tpu_custom_call.1} parent=1 // pred_fallthru
      _
    // Predicated region
    $region118: #{tpu_custom_call.1} parent=1 // pred_check
      _
    $region119: #{tpu_custom_call.1} parent=1 // pred_check_branch
      %256 = sbr.rel (0) target = $region121
    $region120: #{tpu_custom_call.1} parent=1 // pred_region
      %257 = dma.done [#allocation22], 16
    $region121: #{tpu_custom_call.1} parent=1 // pred_fallthru
      _
    // Predicated region
    $region122: #{tpu_custom_call.1} parent=1 // pred_check
      _
    $region123: #{tpu_custom_call.1} parent=1 // pred_check_branch
      %259 = sbr.rel (0) target = $region125
    $region124: #{tpu_custom_call.1} parent=1 // pred_region
      %260 = dma.done [#allocation22], 16
    $region125: #{tpu_custom_call.1} parent=1 // pred_fallthru
      _
    // Predicated region
    $region126: #{tpu_custom_call.1} parent=1 // pred_check
      _
    $region127: #{tpu_custom_call.1} parent=1 // pred_check_branch
      %262 = sbr.rel (0) target = $region129
    $region128: #{tpu_custom_call.1} parent=1 // pred_region
      %263 = dma.done [#allocation25], 512
    $region129: #{tpu_custom_call.1} parent=1 // pred_fallthru
      _
    // Predicated region
    $region130: #{tpu_custom_call.1} parent=1 // pred_check
      _
    $region131: #{tpu_custom_call.1} parent=1 // pred_check_branch
      %265 = sbr.rel (0) target = $region133
    $region132: #{tpu_custom_call.1} parent=1 // pred_region
      %266 = dma.done [#allocation25], 16
    $region133: #{tpu_custom_call.1} parent=1 // pred_fallthru
      _
    // Predicated region
    $region134: #{tpu_custom_call.1} parent=1 // pred_check
      _
    $region135: #{tpu_custom_call.1} parent=1 // pred_check_branch
      %268 = sbr.rel (0) target = $region137
    $region136: #{tpu_custom_call.1} parent=1 // pred_region
      %269 = dma.done [#allocation28], 512
    $region137: #{tpu_custom_call.1} parent=1 // pred_fallthru
      _
    // Predicated region
    $region138: #{tpu_custom_call.1} parent=1 // pred_check
      _
    $region139: #{tpu_custom_call.1} parent=1 // pred_check_branch
      %271 = sbr.rel (0) target = $region141
    $region140: #{tpu_custom_call.1} parent=1 // pred_region
      %272 = dma.done [#allocation28], 16
    $region141: #{tpu_custom_call.1} parent=1 // pred_fallthru
      _
    %v274 = vld [vmem:[#allocation3] sm:$0xf]
    %v275 = vld [vmem:[#allocation3 + $0x4] sm:$0xf]
    %v276 = vld [vmem:[#allocation3 + $0x8] sm:$0xf]
    %v277 = vld [vmem:[#allocation3 + $0xc] sm:$0xf]
    %v278 = vld [vmem:[#allocation3 + $0x10] sm:$0xf]
    %v279 = vld [vmem:[#allocation6] sm:$0xf]
    %v280 = vld [vmem:[#allocation6 + $0x4] sm:$0xf]
    %v281 = vld [vmem:[#allocation6 + $0x8] sm:$0xf]
    %v282 = vld [vmem:[#allocation6 + $0xc] sm:$0xf]
    %v283 = vld [vmem:[#allocation6 + $0x10] sm:$0xf]
    %v284 = vld [vmem:[#allocation9] sm:$0x1f]
    %v285 = vpack.c.bf16 %v284, %v284
    %v286 = vld [vmem:[#allocation11] sm:$0x1]
    %v288 = vlaneseq
    %v289 = vshrl.u32 %v288, 7
    %v290 = vsub.s32 0, %v289
    %v291 = vrot.slane %v286, %v290
    %v298 = vunpack.c.l.b16 %v274
    %v299 = vunpack.c.l.b16 %v275
    %v300 = vunpack.c.l.b16 %v276
    %v301 = vunpack.c.l.b16 %v277
    %v302 = vunpack.c.l.b16 %v278
    %v303 = vpack.c.b16 %v299, %v298
    %v304 = vpack.c.b16 %v301, %v300
    %v305 = vpack.c.b16 %v302, %v302
    %vm306 = vcmask 39936
    %v308 = vsel %vm306, %v303, 0
    %v311 = vsel %vm306, %v304, 0
    %v314 = vsel %vm306, %v305, 0
    %vm316 = vcmask 1041408
    %vm317 = vcmask 1042432
    %v318 = vsel %vm316, 4294967295, 65535
    %v319 = vsel %vm317, %v318, 0
    %v321 = vand.u32 %v285, %v319
    %323 = vmatprep.subr.bf16.mxu0 0
    %324 = vmatpush1.bf16.msra.mxu0 %v321
    %325 = vmatprep.subr.bf16.mxu0 0
    %326 = vmatpush1.bf16.msra.mxu0 0
    %327 = vmatprep.subr.bf16.mxu0 0
    %328 = vmatpush1.bf16.msra.mxu0 0
    %329 = vmatprep.subr.bf16.mxu0 0
    %330 = vmatpush1.bf16.msra.mxu0 0
    %331 = vmatprep.subr.bf16.mxu0 0
    %332 = vmatpush1.bf16.msra.mxu0 0
    %333 = vmatprep.subr.bf16.mxu0 0
    %334 = vmatpush1.bf16.msra.mxu0 0
    %335 = vmatprep.subr.bf16.mxu0 0
    %336 = vmatpush1.bf16.msra.mxu0 0
    %337 = vmatprep.subr.bf16.mxu0 0
    %338 = vmatpush1.bf16.msra.mxu0 0
    %339 = vmatprep.subr.bf16.mxu0 0
    %340 = vmatpush1.bf16.msra.mxu0 0
    %341 = vmatprep.subr.bf16.mxu0 0
    %342 = vmatpush1.bf16.msra.mxu0 0
    %343 = vmatprep.subr.bf16.mxu0 0
    %344 = vmatpush1.bf16.msra.mxu0 0
    %345 = vmatprep.subr.bf16.mxu0 0
    %346 = vmatpush1.bf16.msra.mxu0 0
    %347 = vmatprep.subr.bf16.mxu0 0
    %348 = vmatpush1.bf16.msra.mxu0 0
    %349 = vmatprep.subr.bf16.mxu0 0
    %350 = vmatpush1.bf16.msra.mxu0 0
    %351 = vmatprep.subr.bf16.mxu0 0
    %352 = vmatpush1.bf16.msra.mxu0 0
    %353 = vmatprep.subr.bf16.mxu0 0
    %354 = vmatpush1.bf16.msra.mxu0 0
    %355 = vmatprep.mubr.bf16.mxu0 0
    %356 = vmatmul.mubr.bf16.gmra.mrb[0].mxu0 %v308
    %v357 = vpop.f32.mrb[0].mxu0
    %v358 = vadd.f32 %v291, %v357
    %v359 = vpop.f32.mrb[0].mxu0
    %v360 = vpop.f32.mrb[0].mxu0
    %v361 = vadd.f32 %v291, %v360
    %v362 = vpop.f32.mrb[0].mxu0
    %363 = vmatprep.mubr.bf16.mxu0 0
    %364 = vmatmul.mubr.bf16.gmra.mrb[0].mxu0 %v311
    %v365 = vpop.f32.mrb[0].mxu0
    %v366 = vadd.f32 %v291, %v365
    %v367 = vpop.f32.mrb[0].mxu0
    %v368 = vpop.f32.mrb[0].mxu0
    %v369 = vadd.f32 %v291, %v368
    %v370 = vpop.f32.mrb[0].mxu0
    %371 = vmatprep.mubr.bf16.mxu0 0
    %372 = vmatmul.mubr.bf16.gmra.mrb[0].mxu0 %v314
    %v373 = vpop.f32.mrb[0].mxu0
    %v374 = vadd.f32 %v291, %v373
    %v375 = vpop.f32.mrb[0].mxu0
    %v376 = vpop.f32.mrb[0].mxu0
    %v377 = vpop.f32.mrb[0].mxu0
    %378 = vdwg.mxu0
    %v379 = vunpack.c.l.bf16 %v279
    %v380 = vunpack.c.l.bf16 %v280
    %v381 = vunpack.c.l.bf16 %v281
    %v382 = vunpack.c.l.bf16 %v282
    %v383 = vunpack.c.l.bf16 %v283
    %vm384 = vcmask 64512
    %v385 = vsel %vm384, %v379, 0.0
    %v386 = vrot.slane %v385, 4
    %v387 = vadd.f32 %v385, %v386
    %v388 = vrot.slane %v387, 2
    %v389 = vadd.f32 %v387, %v388
    %v390 = vrot.slane %v389, 1
    %v391 = vadd.f32 %v389, %v390
    %v392 = vsel %vm384, %v380, 0.0
    %v393 = vrot.slane %v392, 4
    %v394 = vadd.f32 %v392, %v393
    %v395 = vrot.slane %v394, 2
    %v396 = vadd.f32 %v394, %v395
    %v397 = vrot.slane %v396, 1
    %v398 = vadd.f32 %v396, %v397
    %v399 = vsel %vm384, %v381, 0.0
    %v400 = vrot.slane %v399, 4
    %v401 = vadd.f32 %v399, %v400
    %v402 = vrot.slane %v401, 2
    %v403 = vadd.f32 %v401, %v402
    %v404 = vrot.slane %v403, 1
    %v405 = vadd.f32 %v403, %v404
    %v406 = vsel %vm384, %v382, 0.0
    %v407 = vrot.slane %v406, 4
    %v408 = vadd.f32 %v406, %v407
    %v409 = vrot.slane %v408, 2
    %v410 = vadd.f32 %v408, %v409
    %v411 = vrot.slane %v410, 1
    %v412 = vadd.f32 %v410, %v411
    %v413 = vsel %vm384, %v383, 0.0
    %v414 = vrot.slane %v413, 4
    %v415 = vadd.f32 %v413, %v414
    %v416 = vrot.slane %v415, 2
    %v417 = vadd.f32 %v415, %v416
    %v418 = vrot.slane %v417, 1
    %v419 = vadd.f32 %v417, %v418
    %421 = vbcast.lane.b32.xlu0 %v391, 256
    %v422 = vpop.permute.xlu0 %421
    %424 = vbcast.lane.b32.xlu0 %v398, 256
    %v425 = vpop.permute.xlu0 %424
    %427 = vbcast.lane.b32.xlu0 %v405, 256
    %v428 = vpop.permute.xlu0 %427
    %430 = vbcast.lane.b32.xlu0 %v412, 256
    %v431 = vpop.permute.xlu0 %430
    %433 = vbcast.lane.b32.xlu0 %v419, 256
    %v434 = vpop.permute.xlu0 %433
    %v435 = vld [vmem:[#allocation18] sm:$0x1]
    %v436 = vld [vmem:[#allocation20] sm:$0x1]
    %v437 = vadd.f32 %v435, %v436
    %v438 = vmax.f32 %v437, 0.0
    %v439 = vmax.f32 %v436, 0.0
    %v441 = vlaneseq
    %v442 = vshrl.u32 %v441, 7
    %v443 = vsub.s32 0, %v442
    %v444 = vrot.slane %v438, %v443
    %v446 = vmul.f32 %v422, %v444
    %v447 = vmul.f32 %v425, %v444
    %v448 = vmul.f32 %v428, %v444
    %v449 = vmul.f32 %v431, %v444
    %v450 = vmul.f32 %v434, %v444
    %v451 = vsub.f32 8.0, %v422
    %v452 = vsub.f32 8.0, %v425
    %v453 = vsub.f32 8.0, %v428
    %v454 = vsub.f32 8.0, %v431
    %v455 = vsub.f32 8.0, %v434
    %v457 = vlaneseq
    %v458 = vshrl.u32 %v457, 7
    %v459 = vsub.s32 0, %v458
    %v460 = vrot.slane %v439, %v459
    %v462 = vmul.f32 %v451, %v460
    %v463 = vmul.f32 %v452, %v460
    %v464 = vmul.f32 %v453, %v460
    %v465 = vmul.f32 %v454, %v460
    %v466 = vmul.f32 %v455, %v460
    %v467 = vadd.f32 %v446, %v462
    %v468 = vadd.f32 %v447, %v463
    %v469 = vadd.f32 %v448, %v464
    %v470 = vadd.f32 %v449, %v465
    %v471 = vadd.f32 %v450, %v466
    %v472 = vpack.c.bf16 %v468, %v467
    %v473 = vpack.c.bf16 %v470, %v469
    %v474 = vpack.c.bf16 %v471, %v471
    %v475 = vld [vmem:[#allocation15] sm:$0xff]
    %v476 = vld [vmem:[#allocation15 + $0x8] sm:$0xff]
    %v477 = vld [vmem:[#allocation15 + $0x10] sm:$0xff]
    %v478 = vld [vmem:[#allocation15 + $0x18] sm:$0xff]
    %v479 = vpack.c.bf16 %v476, %v475
    %v480 = vpack.c.bf16 %v478, %v477
    %v481 = vld [vmem:[#allocation17] sm:$0x1]
    %v483 = vlaneseq
    %v484 = vshrl.u32 %v483, 7
    %v485 = vsub.s32 0, %v484
    %v486 = vrot.slane %v481, %v485
    %vm488 = vcmask 261120
    %v490 = vsel %vm488, %v472, 0
    %v493 = vsel %vm488, %v473, 0
    %v496 = vsel %vm488, %v474, 0
    %498 = vmatprep.subr.bf16.mxu0 0
    %499 = vmatpush1.bf16.msra.mxu0 %v479
    %500 = vmatprep.subr.bf16.mxu0 0
    %501 = vmatpush1.bf16.msra.mxu0 %v480
    %502 = vmatprep.subr.bf16.mxu0 0
    %503 = vmatpush1.bf16.msra.mxu0 0
    %504 = vmatprep.subr.bf16.mxu0 0
    %505 = vmatpush1.bf16.msra.mxu0 0
    %506 = vmatprep.subr.bf16.mxu0 0
    %507 = vmatpush1.bf16.msra.mxu0 0
    %508 = vmatprep.subr.bf16.mxu0 0
    %509 = vmatpush1.bf16.msra.mxu0 0
    %510 = vmatprep.subr.bf16.mxu0 0
    %511 = vmatpush1.bf16.msra.mxu0 0
    %512 = vmatprep.subr.bf16.mxu0 0
    %513 = vmatpush1.bf16.msra.mxu0 0
    %514 = vmatprep.subr.bf16.mxu0 0
    %515 = vmatpush1.bf16.msra.mxu0 0
    %516 = vmatprep.subr.bf16.mxu0 0
    %517 = vmatpush1.bf16.msra.mxu0 0
    %518 = vmatprep.subr.bf16.mxu0 0
    %519 = vmatpush1.bf16.msra.mxu0 0
    %520 = vmatprep.subr.bf16.mxu0 0
    %521 = vmatpush1.bf16.msra.mxu0 0
    %522 = vmatprep.subr.bf16.mxu0 0
    %523 = vmatpush1.bf16.msra.mxu0 0
    %524 = vmatprep.subr.bf16.mxu0 0
    %525 = vmatpush1.bf16.msra.mxu0 0
    %526 = vmatprep.subr.bf16.mxu0 0
    %527 = vmatpush1.bf16.msra.mxu0 0
    %528 = vmatprep.subr.bf16.mxu0 0
    %529 = vmatpush1.bf16.msra.mxu0 0
    %530 = vmatprep.mubr.bf16.mxu0 0
    %531 = vmatmul.mubr.bf16.gmra.mrb[0].mxu0 %v490
    %v532 = vpop.f32.mrb[0].mxu0
    %v533 = vadd.f32 %v486, %v532
    %v534 = vpop.f32.mrb[0].mxu0
    %v535 = vpop.f32.mrb[0].mxu0
    %v536 = vadd.f32 %v486, %v535
    %v537 = vpop.f32.mrb[0].mxu0
    %538 = vmatprep.mubr.bf16.mxu0 0
    %539 = vmatmul.mubr.bf16.gmra.mrb[0].mxu0 %v493
    %v540 = vpop.f32.mrb[0].mxu0
    %v541 = vadd.f32 %v486, %v540
    %v542 = vpop.f32.mrb[0].mxu0
    %v543 = vpop.f32.mrb[0].mxu0
    %v544 = vadd.f32 %v486, %v543
    %v545 = vpop.f32.mrb[0].mxu0
    %546 = vmatprep.mubr.bf16.mxu0 0
    %547 = vmatmul.mubr.bf16.gmra.mrb[0].mxu0 %v496
    %v548 = vpop.f32.mrb[0].mxu0
    %v549 = vadd.f32 %v486, %v548
    %v550 = vpop.f32.mrb[0].mxu0
    %v551 = vpop.f32.mrb[0].mxu0
    %v552 = vpop.f32.mrb[0].mxu0
    %553 = vdwg.mxu0
    %v554 = vadd.f32 %v358, %v533
    %v555 = vadd.f32 %v361, %v536
    %v556 = vadd.f32 %v366, %v541
    %v557 = vadd.f32 %v369, %v544
    %v558 = vadd.f32 %v374, %v549
    %v559 = vld [vmem:[#allocation14] sm:$0x1]
    %v561 = vlaneseq
    %v562 = vshrl.u32 %v561, 7
    %v563 = vsub.s32 0, %v562
    %v564 = vrot.slane %v559, %v563
    %v566 = vadd.f32 %v554, %v564
    %v567 = vadd.f32 %v555, %v564
    %v568 = vadd.f32 %v556, %v564
    %v569 = vadd.f32 %v557, %v564
    %v570 = vadd.f32 %v558, %v564
    %v571 = vmax.f32 %v566, 0.0
    %v572 = vmax.f32 %v567, 0.0
    %v573 = vmax.f32 %v568, 0.0
    %v574 = vmax.f32 %v569, 0.0
    %v575 = vmax.f32 %v570, 0.0
    %v576 = vld [vmem:[#allocation12] sm:$0xff]
    %v577 = vld [vmem:[#allocation12 + $0x8] sm:$0xff]
    %v578 = vld [vmem:[#allocation12 + $0x10] sm:$0xff]
    %v579 = vld [vmem:[#allocation12 + $0x18] sm:$0xff]
    %v580 = vpack.c.bf16 %v577, %v576
    %v581 = vpack.c.bf16 %v579, %v578
    %v582 = vpack.c.bf16 %v572, %v571
    %v583 = vpack.c.bf16 %v574, %v573
    %v584 = vpack.c.bf16 %v575, %v575
    %v588 = vunpack.c.l.b16 %v582
    %v589 = vunpack.c.h.b16 %v582
    %v590 = vunpack.c.l.b16 %v583
    %v591 = vunpack.c.h.b16 %v583
    %v592 = vunpack.c.l.b16 %v584
    %v593 = vpack.c.b16 %v588, %v588
    %v594 = vpack.c.b16 %v589, %v589
    %v595 = vpack.c.b16 %v590, %v590
    %v596 = vpack.c.b16 %v591, %v591
    %v597 = vpack.c.b16 %v592, %v592
    %v599 = vsel %vm384, %v279, 0
    %vm601 = vcmask 1043456
    %v603 = vsel %vm601, %v593, 0
    %605 = vmatprep.subr.bf16.mxu0 0
    %606 = vmatpush1.bf16.msra.mxu0 %v603
    %607 = vmatprep.subr.bf16.mxu0 0
    %608 = vmatpush1.bf16.msra.mxu0 0
    %609 = vmatprep.subr.bf16.mxu0 0
    %610 = vmatpush1.bf16.msra.mxu0 0
    %611 = vmatprep.subr.bf16.mxu0 0
    %612 = vmatpush1.bf16.msra.mxu0 0
    %613 = vmatprep.subr.bf16.mxu0 0
    %614 = vmatpush1.bf16.msra.mxu0 0
    %615 = vmatprep.subr.bf16.mxu0 0
    %616 = vmatpush1.bf16.msra.mxu0 0
    %617 = vmatprep.subr.bf16.mxu0 0
    %618 = vmatpush1.bf16.msra.mxu0 0
    %619 = vmatprep.subr.bf16.mxu0 0
    %620 = vmatpush1.bf16.msra.mxu0 0
    %621 = vmatprep.subr.bf16.mxu0 0
    %622 = vmatpush1.bf16.msra.mxu0 0
    %623 = vmatprep.subr.bf16.mxu0 0
    %624 = vmatpush1.bf16.msra.mxu0 0
    %625 = vmatprep.subr.bf16.mxu0 0
    %626 = vmatpush1.bf16.msra.mxu0 0
    %627 = vmatprep.subr.bf16.mxu0 0
    %628 = vmatpush1.bf16.msra.mxu0 0
    %629 = vmatprep.subr.bf16.mxu0 0
    %630 = vmatpush1.bf16.msra.mxu0 0
    %631 = vmatprep.subr.bf16.mxu0 0
    %632 = vmatpush1.bf16.msra.mxu0 0
    %633 = vmatprep.subr.bf16.mxu0 0
    %634 = vmatpush1.bf16.msra.mxu0 0
    %635 = vmatprep.subr.bf16.mxu0 0
    %636 = vmatpush1.bf16.msra.mxu0 0
    %637 = vmatprep.mubr.bf16.mxu0 0
    %638 = vmatmul.mubr.bf16.gmra.mrb[0].mxu0 %v599
    %v639 = vpop.f32.mrb[0].mxu0
    %v640 = vadd.f32 0.0, %v639
    %v641 = vpop.f32.mrb[0].mxu0
    %v642 = vpop.f32.mrb[0].mxu0
    %v643 = vpop.f32.mrb[0].mxu0
    %644 = vdwg.mxu0
    %v646 = vsel %vm384, %v280, 0
    %v649 = vsel %vm601, %v594, 0
    %651 = vmatprep.subr.bf16.mxu0 0
    %652 = vmatpush1.bf16.msra.mxu0 %v649
    %653 = vmatprep.subr.bf16.mxu0 0
    %654 = vmatpush1.bf16.msra.mxu0 0
    %655 = vmatprep.subr.bf16.mxu0 0
    %656 = vmatpush1.bf16.msra.mxu0 0
    %657 = vmatprep.subr.bf16.mxu0 0
    %658 = vmatpush1.bf16.msra.mxu0 0
    %659 = vmatprep.subr.bf16.mxu0 0
    %660 = vmatpush1.bf16.msra.mxu0 0
    %661 = vmatprep.subr.bf16.mxu0 0
    %662 = vmatpush1.bf16.msra.mxu0 0
    %663 = vmatprep.subr.bf16.mxu0 0
    %664 = vmatpush1.bf16.msra.mxu0 0
    %665 = vmatprep.subr.bf16.mxu0 0
    %666 = vmatpush1.bf16.msra.mxu0 0
    %667 = vmatprep.subr.bf16.mxu0 0
    %668 = vmatpush1.bf16.msra.mxu0 0
    %669 = vmatprep.subr.bf16.mxu0 0
    %670 = vmatpush1.bf16.msra.mxu0 0
    %671 = vmatprep.subr.bf16.mxu0 0
    %672 = vmatpush1.bf16.msra.mxu0 0
    %673 = vmatprep.subr.bf16.mxu0 0
    %674 = vmatpush1.bf16.msra.mxu0 0
    %675 = vmatprep.subr.bf16.mxu0 0
    %676 = vmatpush1.bf16.msra.mxu0 0
    %677 = vmatprep.subr.bf16.mxu0 0
    %678 = vmatpush1.bf16.msra.mxu0 0
    %679 = vmatprep.subr.bf16.mxu0 0
    %680 = vmatpush1.bf16.msra.mxu0 0
    %681 = vmatprep.subr.bf16.mxu0 0
    %682 = vmatpush1.bf16.msra.mxu0 0
    %683 = vmatprep.mubr.bf16.mxu0 0
    %684 = vmatmul.mubr.bf16.gmra.mrb[0].mxu0 %v646
    %v685 = vpop.f32.mrb[0].mxu0
    %v686 = vadd.f32 0.0, %v685
    %v687 = vpop.f32.mrb[0].mxu0
    %v688 = vpop.f32.mrb[0].mxu0
    %v689 = vpop.f32.mrb[0].mxu0
    %690 = vdwg.mxu0
    %v692 = vsel %vm384, %v281, 0
    %v695 = vsel %vm601, %v595, 0
    %697 = vmatprep.subr.bf16.mxu0 0
    %698 = vmatpush1.bf16.msra.mxu0 %v695
    %699 = vmatprep.subr.bf16.mxu0 0
    %700 = vmatpush1.bf16.msra.mxu0 0
    %701 = vmatprep.subr.bf16.mxu0 0
    %702 = vmatpush1.bf16.msra.mxu0 0
    %703 = vmatprep.subr.bf16.mxu0 0
    %704 = vmatpush1.bf16.msra.mxu0 0
    %705 = vmatprep.subr.bf16.mxu0 0
    %706 = vmatpush1.bf16.msra.mxu0 0
    %707 = vmatprep.subr.bf16.mxu0 0
    %708 = vmatpush1.bf16.msra.mxu0 0
    %709 = vmatprep.subr.bf16.mxu0 0
    %710 = vmatpush1.bf16.msra.mxu0 0
    %711 = vmatprep.subr.bf16.mxu0 0
    %712 = vmatpush1.bf16.msra.mxu0 0
    %713 = vmatprep.subr.bf16.mxu0 0
    %714 = vmatpush1.bf16.msra.mxu0 0
    %715 = vmatprep.subr.bf16.mxu0 0
    %716 = vmatpush1.bf16.msra.mxu0 0
    %717 = vmatprep.subr.bf16.mxu0 0
    %718 = vmatpush1.bf16.msra.mxu0 0
    %719 = vmatprep.subr.bf16.mxu0 0
    %720 = vmatpush1.bf16.msra.mxu0 0
    %721 = vmatprep.subr.bf16.mxu0 0
    %722 = vmatpush1.bf16.msra.mxu0 0
    %723 = vmatprep.subr.bf16.mxu0 0
    %724 = vmatpush1.bf16.msra.mxu0 0
    %725 = vmatprep.subr.bf16.mxu0 0
    %726 = vmatpush1.bf16.msra.mxu0 0
    %727 = vmatprep.subr.bf16.mxu0 0
    %728 = vmatpush1.bf16.msra.mxu0 0
    %729 = vmatprep.mubr.bf16.mxu0 0
    %730 = vmatmul.mubr.bf16.gmra.mrb[0].mxu0 %v692
    %v731 = vpop.f32.mrb[0].mxu0
    %v732 = vadd.f32 0.0, %v731
    %v733 = vpop.f32.mrb[0].mxu0
    %v734 = vpop.f32.mrb[0].mxu0
    %v735 = vpop.f32.mrb[0].mxu0
    %736 = vdwg.mxu0
    %v738 = vsel %vm384, %v282, 0
    %v741 = vsel %vm601, %v596, 0
    %743 = vmatprep.subr.bf16.mxu0 0
    %744 = vmatpush1.bf16.msra.mxu0 %v741
    %745 = vmatprep.subr.bf16.mxu0 0
    %746 = vmatpush1.bf16.msra.mxu0 0
    %747 = vmatprep.subr.bf16.mxu0 0
    %748 = vmatpush1.bf16.msra.mxu0 0
    %749 = vmatprep.subr.bf16.mxu0 0
    %750 = vmatpush1.bf16.msra.mxu0 0
    %751 = vmatprep.subr.bf16.mxu0 0
    %752 = vmatpush1.bf16.msra.mxu0 0
    %753 = vmatprep.subr.bf16.mxu0 0
    %754 = vmatpush1.bf16.msra.mxu0 0
    %755 = vmatprep.subr.bf16.mxu0 0
    %756 = vmatpush1.bf16.msra.mxu0 0
    %757 = vmatprep.subr.bf16.mxu0 0
    %758 = vmatpush1.bf16.msra.mxu0 0
    %759 = vmatprep.subr.bf16.mxu0 0
    %760 = vmatpush1.bf16.msra.mxu0 0
    %761 = vmatprep.subr.bf16.mxu0 0
    %762 = vmatpush1.bf16.msra.mxu0 0
    %763 = vmatprep.subr.bf16.mxu0 0
    %764 = vmatpush1.bf16.msra.mxu0 0
    %765 = vmatprep.subr.bf16.mxu0 0
    %766 = vmatpush1.bf16.msra.mxu0 0
    %767 = vmatprep.subr.bf16.mxu0 0
    %768 = vmatpush1.bf16.msra.mxu0 0
    %769 = vmatprep.subr.bf16.mxu0 0
    %770 = vmatpush1.bf16.msra.mxu0 0
    %771 = vmatprep.subr.bf16.mxu0 0
    %772 = vmatpush1.bf16.msra.mxu0 0
    %773 = vmatprep.subr.bf16.mxu0 0
    %774 = vmatpush1.bf16.msra.mxu0 0
    %775 = vmatprep.mubr.bf16.mxu0 0
    %776 = vmatmul.mubr.bf16.gmra.mrb[0].mxu0 %v738
    %v777 = vpop.f32.mrb[0].mxu0
    %v778 = vadd.f32 0.0, %v777
    %v779 = vpop.f32.mrb[0].mxu0
    %v780 = vpop.f32.mrb[0].mxu0
    %v781 = vpop.f32.mrb[0].mxu0
    %782 = vdwg.mxu0
    %v784 = vsel %vm384, %v283, 0
    %v787 = vsel %vm601, %v597, 0
    %789 = vmatprep.subr.bf16.mxu0 0
    %790 = vmatpush1.bf16.msra.mxu0 %v787
    %791 = vmatprep.subr.bf16.mxu0 0
    %792 = vmatpush1.bf16.msra.mxu0 0
    %793 = vmatprep.subr.bf16.mxu0 0
    %794 = vmatpush1.bf16.msra.mxu0 0
    %795 = vmatprep.subr.bf16.mxu0 0
    %796 = vmatpush1.bf16.msra.mxu0 0
    %797 = vmatprep.subr.bf16.mxu0 0
    %798 = vmatpush1.bf16.msra.mxu0 0
    %799 = vmatprep.subr.bf16.mxu0 0
    %800 = vmatpush1.bf16.msra.mxu0 0
    %801 = vmatprep.subr.bf16.mxu0 0
    %802 = vmatpush1.bf16.msra.mxu0 0
    %803 = vmatprep.subr.bf16.mxu0 0
    %804 = vmatpush1.bf16.msra.mxu0 0
    %805 = vmatprep.subr.bf16.mxu0 0
    %806 = vmatpush1.bf16.msra.mxu0 0
    %807 = vmatprep.subr.bf16.mxu0 0
    %808 = vmatpush1.bf16.msra.mxu0 0
    %809 = vmatprep.subr.bf16.mxu0 0
    %810 = vmatpush1.bf16.msra.mxu0 0
    %811 = vmatprep.subr.bf16.mxu0 0
    %812 = vmatpush1.bf16.msra.mxu0 0
    %813 = vmatprep.subr.bf16.mxu0 0
    %814 = vmatpush1.bf16.msra.mxu0 0
    %815 = vmatprep.subr.bf16.mxu0 0
    %816 = vmatpush1.bf16.msra.mxu0 0
    %817 = vmatprep.subr.bf16.mxu0 0
    %818 = vmatpush1.bf16.msra.mxu0 0
    %819 = vmatprep.subr.bf16.mxu0 0
    %820 = vmatpush1.bf16.msra.mxu0 0
    %821 = vmatprep.mubr.bf16.mxu0 0
    %822 = vmatmul.mubr.bf16.gmra.mrb[0].mxu0 %v784
    %v823 = vpop.f32.mrb[0].mxu0
    %v824 = vadd.f32 0.0, %v823
    %v825 = vpop.f32.mrb[0].mxu0
    %v826 = vpop.f32.mrb[0].mxu0
    %v827 = vpop.f32.mrb[0].mxu0
    %828 = vdwg.mxu0
    %v829 = vpack.c.bf16 %v686, %v640
    %v830 = vpack.c.bf16 %v778, %v732
    %v831 = vpack.c.bf16 %v824, %v824
    %v833 = vsel %vm488, %v829, 0
    %v836 = vsel %vm488, %v830, 0
    %v839 = vsel %vm488, %v831, 0
    %841 = vmatprep.subr.bf16.mxu0 0
    %842 = vmatpush1.bf16.msra.mxu0 %v580
    %843 = vmatprep.subr.bf16.mxu0 0
    %844 = vmatpush1.bf16.msra.mxu0 %v581
    %845 = vmatprep.subr.bf16.mxu0 0
    %846 = vmatpush1.bf16.msra.mxu0 0
    %847 = vmatprep.subr.bf16.mxu0 0
    %848 = vmatpush1.bf16.msra.mxu0 0
    %849 = vmatprep.subr.bf16.mxu0 0
    %850 = vmatpush1.bf16.msra.mxu0 0
    %851 = vmatprep.subr.bf16.mxu0 0
    %852 = vmatpush1.bf16.msra.mxu0 0
    %853 = vmatprep.subr.bf16.mxu0 0
    %854 = vmatpush1.bf16.msra.mxu0 0
    %855 = vmatprep.subr.bf16.mxu0 0
    %856 = vmatpush1.bf16.msra.mxu0 0
    %857 = vmatprep.subr.bf16.mxu0 0
    %858 = vmatpush1.bf16.msra.mxu0 0
    %859 = vmatprep.subr.bf16.mxu0 0
    %860 = vmatpush1.bf16.msra.mxu0 0
    %861 = vmatprep.subr.bf16.mxu0 0
    %862 = vmatpush1.bf16.msra.mxu0 0
    %863 = vmatprep.subr.bf16.mxu0 0
    %864 = vmatpush1.bf16.msra.mxu0 0
    %865 = vmatprep.subr.bf16.mxu0 0
    %866 = vmatpush1.bf16.msra.mxu0 0
    %867 = vmatprep.subr.bf16.mxu0 0
    %868 = vmatpush1.bf16.msra.mxu0 0
    %869 = vmatprep.subr.bf16.mxu0 0
    %870 = vmatpush1.bf16.msra.mxu0 0
    %871 = vmatprep.subr.bf16.mxu0 0
    %872 = vmatpush1.bf16.msra.mxu0 0
    %873 = vmatprep.mubr.bf16.mxu0 0
    %874 = vmatmul.mubr.bf16.gmra.mrb[0].mxu0 %v833
    %v875 = vpop.f32.mrb[0].mxu0
    %v876 = vadd.f32 %v566, %v875
    %v877 = vpop.f32.mrb[0].mxu0
    %v878 = vpop.f32.mrb[0].mxu0
    %v879 = vadd.f32 %v567, %v878
    %v880 = vpop.f32.mrb[0].mxu0
    %881 = vmatprep.mubr.bf16.mxu0 0
    %882 = vmatmul.mubr.bf16.gmra.mrb[0].mxu0 %v836
    %v883 = vpop.f32.mrb[0].mxu0
    %v884 = vadd.f32 %v568, %v883
    %v885 = vpop.f32.mrb[0].mxu0
    %v886 = vpop.f32.mrb[0].mxu0
    %v887 = vadd.f32 %v569, %v886
    %v888 = vpop.f32.mrb[0].mxu0
    %889 = vmatprep.mubr.bf16.mxu0 0
    %890 = vmatmul.mubr.bf16.gmra.mrb[0].mxu0 %v839
    %v891 = vpop.f32.mrb[0].mxu0
    %v892 = vadd.f32 %v570, %v891
    %v893 = vpop.f32.mrb[0].mxu0
    %v894 = vpop.f32.mrb[0].mxu0
    %v895 = vpop.f32.mrb[0].mxu0
    %896 = vdwg.mxu0
    %v897 = vmax.f32 %v876, 0.0
    %v898 = vmax.f32 %v879, 0.0
    %v899 = vmax.f32 %v884, 0.0
    %v900 = vmax.f32 %v887, 0.0
    %v901 = vmax.f32 %v892, 0.0
    %v902 = vpack.c.bf16 %v898, %v897
    %v903 = vpack.c.bf16 %v900, %v899
    %v904 = vpack.c.bf16 %v901, %v901
    %v908 = vunpack.c.l.b16 %v902
    %v909 = vunpack.c.h.b16 %v902
    %v910 = vunpack.c.l.b16 %v903
    %v911 = vunpack.c.h.b16 %v903
    %v912 = vunpack.c.l.b16 %v904
    %v913 = vpack.c.b16 %v908, %v908
    %v914 = vpack.c.b16 %v909, %v909
    %v915 = vpack.c.b16 %v910, %v910
    %v916 = vpack.c.b16 %v911, %v911
    %v917 = vpack.c.b16 %v912, %v912
    %v919 = vsel %vm601, %v913, 0
    %921 = vmatprep.subr.bf16.mxu0 0
    %922 = vmatpush1.bf16.msra.mxu0 %v919
    %923 = vmatprep.subr.bf16.mxu0 0
    %924 = vmatpush1.bf16.msra.mxu0 0
    %925 = vmatprep.subr.bf16.mxu0 0
    %926 = vmatpush1.bf16.msra.mxu0 0
    %927 = vmatprep.subr.bf16.mxu0 0
    %928 = vmatpush1.bf16.msra.mxu0 0
    %929 = vmatprep.subr.bf16.mxu0 0
    %930 = vmatpush1.bf16.msra.mxu0 0
    %931 = vmatprep.subr.bf16.mxu0 0
    %932 = vmatpush1.bf16.msra.mxu0 0
    %933 = vmatprep.subr.bf16.mxu0 0
    %934 = vmatpush1.bf16.msra.mxu0 0
    %935 = vmatprep.subr.bf16.mxu0 0
    %936 = vmatpush1.bf16.msra.mxu0 0
    %937 = vmatprep.subr.bf16.mxu0 0
    %938 = vmatpush1.bf16.msra.mxu0 0
    %939 = vmatprep.subr.bf16.mxu0 0
    %940 = vmatpush1.bf16.msra.mxu0 0
    %941 = vmatprep.subr.bf16.mxu0 0
    %942 = vmatpush1.bf16.msra.mxu0 0
    %943 = vmatprep.subr.bf16.mxu0 0
    %944 = vmatpush1.bf16.msra.mxu0 0
    %945 = vmatprep.subr.bf16.mxu0 0
    %946 = vmatpush1.bf16.msra.mxu0 0
    %947 = vmatprep.subr.bf16.mxu0 0
    %948 = vmatpush1.bf16.msra.mxu0 0
    %949 = vmatprep.subr.bf16.mxu0 0
    %950 = vmatpush1.bf16.msra.mxu0 0
    %951 = vmatprep.subr.bf16.mxu0 0
    %952 = vmatpush1.bf16.msra.mxu0 0
    %953 = vmatprep.mubr.bf16.mxu0 0
    %954 = vmatmul.mubr.bf16.gmra.mrb[0].mxu0 %v599
    %v955 = vpop.f32.mrb[0].mxu0
    %v956 = vadd.f32 0.0, %v955
    %v957 = vpop.f32.mrb[0].mxu0
    %v958 = vpop.f32.mrb[0].mxu0
    %v959 = vpop.f32.mrb[0].mxu0
    %960 = vdwg.mxu0
    %v962 = vsel %vm601, %v914, 0
    %964 = vmatprep.subr.bf16.mxu0 0
    %965 = vmatpush1.bf16.msra.mxu0 %v962
    %966 = vmatprep.subr.bf16.mxu0 0
    %967 = vmatpush1.bf16.msra.mxu0 0
    %968 = vmatprep.subr.bf16.mxu0 0
    %969 = vmatpush1.bf16.msra.mxu0 0
    %970 = vmatprep.subr.bf16.mxu0 0
    %971 = vmatpush1.bf16.msra.mxu0 0
    %972 = vmatprep.subr.bf16.mxu0 0
    %973 = vmatpush1.bf16.msra.mxu0 0
    %974 = vmatprep.subr.bf16.mxu0 0
    %975 = vmatpush1.bf16.msra.mxu0 0
    %976 = vmatprep.subr.bf16.mxu0 0
    %977 = vmatpush1.bf16.msra.mxu0 0
    %978 = vmatprep.subr.bf16.mxu0 0
    %979 = vmatpush1.bf16.msra.mxu0 0
    %980 = vmatprep.subr.bf16.mxu0 0
    %981 = vmatpush1.bf16.msra.mxu0 0
    %982 = vmatprep.subr.bf16.mxu0 0
    %983 = vmatpush1.bf16.msra.mxu0 0
    %984 = vmatprep.subr.bf16.mxu0 0
    %985 = vmatpush1.bf16.msra.mxu0 0
    %986 = vmatprep.subr.bf16.mxu0 0
    %987 = vmatpush1.bf16.msra.mxu0 0
    %988 = vmatprep.subr.bf16.mxu0 0
    %989 = vmatpush1.bf16.msra.mxu0 0
    %990 = vmatprep.subr.bf16.mxu0 0
    %991 = vmatpush1.bf16.msra.mxu0 0
    %992 = vmatprep.subr.bf16.mxu0 0
    %993 = vmatpush1.bf16.msra.mxu0 0
    %994 = vmatprep.subr.bf16.mxu0 0
    %995 = vmatpush1.bf16.msra.mxu0 0
    %996 = vmatprep.mubr.bf16.mxu0 0
    %997 = vmatmul.mubr.bf16.gmra.mrb[0].mxu0 %v646
    %v998 = vpop.f32.mrb[0].mxu0
    %v999 = vadd.f32 0.0, %v998
    %v1000 = vpop.f32.mrb[0].mxu0
    %v1001 = vpop.f32.mrb[0].mxu0
    %v1002 = vpop.f32.mrb[0].mxu0
    %1003 = vdwg.mxu0
    %v1005 = vsel %vm601, %v915, 0
    %1007 = vmatprep.subr.bf16.mxu0 0
    %1008 = vmatpush1.bf16.msra.mxu0 %v1005
    %1009 = vmatprep.subr.bf16.mxu0 0
    %1010 = vmatpush1.bf16.msra.mxu0 0
    %1011 = vmatprep.subr.bf16.mxu0 0
    %1012 = vmatpush1.bf16.msra.mxu0 0
    %1013 = vmatprep.subr.bf16.mxu0 0
    %1014 = vmatpush1.bf16.msra.mxu0 0
    %1015 = vmatprep.subr.bf16.mxu0 0
    %1016 = vmatpush1.bf16.msra.mxu0 0
    %1017 = vmatprep.subr.bf16.mxu0 0
    %1018 = vmatpush1.bf16.msra.mxu0 0
    %1019 = vmatprep.subr.bf16.mxu0 0
    %1020 = vmatpush1.bf16.msra.mxu0 0
    %1021 = vmatprep.subr.bf16.mxu0 0
    %1022 = vmatpush1.bf16.msra.mxu0 0
    %1023 = vmatprep.subr.bf16.mxu0 0
    %1024 = vmatpush1.bf16.msra.mxu0 0
    %1025 = vmatprep.subr.bf16.mxu0 0
    %1026 = vmatpush1.bf16.msra.mxu0 0
    %1027 = vmatprep.subr.bf16.mxu0 0
    %1028 = vmatpush1.bf16.msra.mxu0 0
    %1029 = vmatprep.subr.bf16.mxu0 0
    %1030 = vmatpush1.bf16.msra.mxu0 0
    %1031 = vmatprep.subr.bf16.mxu0 0
    %1032 = vmatpush1.bf16.msra.mxu0 0
    %1033 = vmatprep.subr.bf16.mxu0 0
    %1034 = vmatpush1.bf16.msra.mxu0 0
    %1035 = vmatprep.subr.bf16.mxu0 0
    %1036 = vmatpush1.bf16.msra.mxu0 0
    %1037 = vmatprep.subr.bf16.mxu0 0
    %1038 = vmatpush1.bf16.msra.mxu0 0
    %1039 = vmatprep.mubr.bf16.mxu0 0
    %1040 = vmatmul.mubr.bf16.gmra.mrb[0].mxu0 %v692
    %v1041 = vpop.f32.mrb[0].mxu0
    %v1042 = vadd.f32 0.0, %v1041
    %v1043 = vpop.f32.mrb[0].mxu0
    %v1044 = vpop.f32.mrb[0].mxu0
    %v1045 = vpop.f32.mrb[0].mxu0
    %1046 = vdwg.mxu0
    %v1048 = vsel %vm601, %v916, 0
    %1050 = vmatprep.subr.bf16.mxu0 0
    %1051 = vmatpush1.bf16.msra.mxu0 %v1048
    %1052 = vmatprep.subr.bf16.mxu0 0
    %1053 = vmatpush1.bf16.msra.mxu0 0
    %1054 = vmatprep.subr.bf16.mxu0 0
    %1055 = vmatpush1.bf16.msra.mxu0 0
    %1056 = vmatprep.subr.bf16.mxu0 0
    %1057 = vmatpush1.bf16.msra.mxu0 0
    %1058 = vmatprep.subr.bf16.mxu0 0
    %1059 = vmatpush1.bf16.msra.mxu0 0
    %1060 = vmatprep.subr.bf16.mxu0 0
    %1061 = vmatpush1.bf16.msra.mxu0 0
    %1062 = vmatprep.subr.bf16.mxu0 0
    %1063 = vmatpush1.bf16.msra.mxu0 0
    %1064 = vmatprep.subr.bf16.mxu0 0
    %1065 = vmatpush1.bf16.msra.mxu0 0
    %1066 = vmatprep.subr.bf16.mxu0 0
    %1067 = vmatpush1.bf16.msra.mxu0 0
    %1068 = vmatprep.subr.bf16.mxu0 0
    %1069 = vmatpush1.bf16.msra.mxu0 0
    %1070 = vmatprep.subr.bf16.mxu0 0
    %1071 = vmatpush1.bf16.msra.mxu0 0
    %1072 = vmatprep.subr.bf16.mxu0 0
    %1073 = vmatpush1.bf16.msra.mxu0 0
    %1074 = vmatprep.subr.bf16.mxu0 0
    %1075 = vmatpush1.bf16.msra.mxu0 0
    %1076 = vmatprep.subr.bf16.mxu0 0
    %1077 = vmatpush1.bf16.msra.mxu0 0
    %1078 = vmatprep.subr.bf16.mxu0 0
    %1079 = vmatpush1.bf16.msra.mxu0 0
    %1080 = vmatprep.subr.bf16.mxu0 0
    %1081 = vmatpush1.bf16.msra.mxu0 0
    %1082 = vmatprep.mubr.bf16.mxu0 0
    %1083 = vmatmul.mubr.bf16.gmra.mrb[0].mxu0 %v738
    %v1084 = vpop.f32.mrb[0].mxu0
    %v1085 = vadd.f32 0.0, %v1084
    %v1086 = vpop.f32.mrb[0].mxu0
    %v1087 = vpop.f32.mrb[0].mxu0
    %v1088 = vpop.f32.mrb[0].mxu0
    %1089 = vdwg.mxu0
    %v1091 = vsel %vm601, %v917, 0
    %1093 = vmatprep.subr.bf16.mxu0 0
    %1094 = vmatpush1.bf16.msra.mxu0 %v1091
    %1095 = vmatprep.subr.bf16.mxu0 0
    %1096 = vmatpush1.bf16.msra.mxu0 0
    %1097 = vmatprep.subr.bf16.mxu0 0
    %1098 = vmatpush1.bf16.msra.mxu0 0
    %1099 = vmatprep.subr.bf16.mxu0 0
    %1100 = vmatpush1.bf16.msra.mxu0 0
    %1101 = vmatprep.subr.bf16.mxu0 0
    %1102 = vmatpush1.bf16.msra.mxu0 0
    %1103 = vmatprep.subr.bf16.mxu0 0
    %1104 = vmatpush1.bf16.msra.mxu0 0
    %1105 = vmatprep.subr.bf16.mxu0 0
    %1106 = vmatpush1.bf16.msra.mxu0 0
    %1107 = vmatprep.subr.bf16.mxu0 0
    %1108 = vmatpush1.bf16.msra.mxu0 0
    %1109 = vmatprep.subr.bf16.mxu0 0
    %1110 = vmatpush1.bf16.msra.mxu0 0
    %1111 = vmatprep.subr.bf16.mxu0 0
    %1112 = vmatpush1.bf16.msra.mxu0 0
    %1113 = vmatprep.subr.bf16.mxu0 0
    %1114 = vmatpush1.bf16.msra.mxu0 0
    %1115 = vmatprep.subr.bf16.mxu0 0
    %1116 = vmatpush1.bf16.msra.mxu0 0
    %1117 = vmatprep.subr.bf16.mxu0 0
    %1118 = vmatpush1.bf16.msra.mxu0 0
    %1119 = vmatprep.subr.bf16.mxu0 0
    %1120 = vmatpush1.bf16.msra.mxu0 0
    %1121 = vmatprep.subr.bf16.mxu0 0
    %1122 = vmatpush1.bf16.msra.mxu0 0
    %1123 = vmatprep.subr.bf16.mxu0 0
    %1124 = vmatpush1.bf16.msra.mxu0 0
    %1125 = vmatprep.mubr.bf16.mxu0 0
    %1126 = vmatmul.mubr.bf16.gmra.mrb[0].mxu0 %v784
    %v1127 = vpop.f32.mrb[0].mxu0
    %v1128 = vadd.f32 0.0, %v1127
    %v1129 = vpop.f32.mrb[0].mxu0
    %v1130 = vpop.f32.mrb[0].mxu0
    %v1131 = vpop.f32.mrb[0].mxu0
    %1132 = vdwg.mxu0
    %v1133 = vpack.c.bf16 %v999, %v956
    %v1134 = vpack.c.bf16 %v1085, %v1042
    %v1135 = vpack.c.bf16 %v1128, %v1128
    %v1137 = vsel %vm488, %v1133, 0
    %v1140 = vsel %vm488, %v1134, 0
    %v1143 = vsel %vm488, %v1135, 0
    %1145 = vmatprep.subr.bf16.mxu0 0
    %1146 = vmatpush1.bf16.msra.mxu0 %v580
    %1147 = vmatprep.subr.bf16.mxu0 0
    %1148 = vmatpush1.bf16.msra.mxu0 %v581
    %1149 = vmatprep.subr.bf16.mxu0 0
    %1150 = vmatpush1.bf16.msra.mxu0 0
    %1151 = vmatprep.subr.bf16.mxu0 0
    %1152 = vmatpush1.bf16.msra.mxu0 0
    %1153 = vmatprep.subr.bf16.mxu0 0
    %1154 = vmatpush1.bf16.msra.mxu0 0
    %1155 = vmatprep.subr.bf16.mxu0 0
    %1156 = vmatpush1.bf16.msra.mxu0 0
    %1157 = vmatprep.subr.bf16.mxu0 0
    %1158 = vmatpush1.bf16.msra.mxu0 0
    %1159 = vmatprep.subr.bf16.mxu0 0
    %1160 = vmatpush1.bf16.msra.mxu0 0
    %1161 = vmatprep.subr.bf16.mxu0 0
    %1162 = vmatpush1.bf16.msra.mxu0 0
    %1163 = vmatprep.subr.bf16.mxu0 0
    %1164 = vmatpush1.bf16.msra.mxu0 0
    %1165 = vmatprep.subr.bf16.mxu0 0
    %1166 = vmatpush1.bf16.msra.mxu0 0
    %1167 = vmatprep.subr.bf16.mxu0 0
    %1168 = vmatpush1.bf16.msra.mxu0 0
    %1169 = vmatprep.subr.bf16.mxu0 0
    %1170 = vmatpush1.bf16.msra.mxu0 0
    %1171 = vmatprep.subr.bf16.mxu0 0
    %1172 = vmatpush1.bf16.msra.mxu0 0
    %1173 = vmatprep.subr.bf16.mxu0 0
    %1174 = vmatpush1.bf16.msra.mxu0 0
    %1175 = vmatprep.subr.bf16.mxu0 0
    %1176 = vmatpush1.bf16.msra.mxu0 0
    %1177 = vmatprep.mubr.bf16.mxu0 0
    %1178 = vmatmul.mubr.bf16.gmra.mrb[0].mxu0 %v1137
    %v1179 = vpop.f32.mrb[0].mxu0
    %v1180 = vadd.f32 %v566, %v1179
    %v1181 = vpop.f32.mrb[0].mxu0
    %v1182 = vpop.f32.mrb[0].mxu0
    %v1183 = vadd.f32 %v567, %v1182
    %v1184 = vpop.f32.mrb[0].mxu0
    %1185 = vmatprep.mubr.bf16.mxu0 0
    %1186 = vmatmul.mubr.bf16.gmra.mrb[0].mxu0 %v1140
    %v1187 = vpop.f32.mrb[0].mxu0
    %v1188 = vadd.f32 %v568, %v1187
    %v1189 = vpop.f32.mrb[0].mxu0
    %v1190 = vpop.f32.mrb[0].mxu0
    %v1191 = vadd.f32 %v569, %v1190
    %v1192 = vpop.f32.mrb[0].mxu0
    %1193 = vmatprep.mubr.bf16.mxu0 0
    %1194 = vmatmul.mubr.bf16.gmra.mrb[0].mxu0 %v1143
    %v1195 = vpop.f32.mrb[0].mxu0
    %v1196 = vadd.f32 %v570, %v1195
    %v1197 = vpop.f32.mrb[0].mxu0
    %v1198 = vpop.f32.mrb[0].mxu0
    %v1199 = vpop.f32.mrb[0].mxu0
    %1200 = vdwg.mxu0
    %v1201 = vmax.f32 %v1180, 0.0
    %v1202 = vmax.f32 %v1183, 0.0
    %v1203 = vmax.f32 %v1188, 0.0
    %v1204 = vmax.f32 %v1191, 0.0
    %v1205 = vmax.f32 %v1196, 0.0
    %v1206 = vsel %vm488, %v1201, 0.0
    %v1207 = vrot.slane %v1206, 4
    %v1208 = vadd.f32 %v1206, %v1207
    %v1209 = vrot.slane %v1208, 2
    %v1210 = vadd.f32 %v1208, %v1209
    %v1211 = vrot.slane %v1210, 1
    %v1212 = vadd.f32 %v1210, %v1211
    %v1213 = vsel %vm488, %v1202, 0.0
    %v1214 = vrot.slane %v1213, 4
    %v1215 = vadd.f32 %v1213, %v1214
    %v1216 = vrot.slane %v1215, 2
    %v1217 = vadd.f32 %v1215, %v1216
    %v1218 = vrot.slane %v1217, 1
    %v1219 = vadd.f32 %v1217, %v1218
    %v1220 = vsel %vm488, %v1203, 0.0
    %v1221 = vrot.slane %v1220, 4
    %v1222 = vadd.f32 %v1220, %v1221
    %v1223 = vrot.slane %v1222, 2
    %v1224 = vadd.f32 %v1222, %v1223
    %v1225 = vrot.slane %v1224, 1
    %v1226 = vadd.f32 %v1224, %v1225
    %v1227 = vsel %vm488, %v1204, 0.0
    %v1228 = vrot.slane %v1227, 4
    %v1229 = vadd.f32 %v1227, %v1228
    %v1230 = vrot.slane %v1229, 2
    %v1231 = vadd.f32 %v1229, %v1230
    %v1232 = vrot.slane %v1231, 1
    %v1233 = vadd.f32 %v1231, %v1232
    %v1234 = vsel %vm488, %v1205, 0.0
    %v1235 = vrot.slane %v1234, 4
    %v1236 = vadd.f32 %v1234, %v1235
    %v1237 = vrot.slane %v1236, 2
    %v1238 = vadd.f32 %v1236, %v1237
    %v1239 = vrot.slane %v1238, 1
    %v1240 = vadd.f32 %v1238, %v1239
    %v1241 = vpack.c.bf16 %v1212, %v1212
    %v1242 = vpack.c.bf16 %v1219, %v1219
    %v1243 = vpack.c.bf16 %v1226, %v1226
    %v1244 = vpack.c.bf16 %v1233, %v1233
    %v1245 = vpack.c.bf16 %v1240, %v1240
    %v1246 = vld [vmem:[#allocation24] sm:$0xff]
    %v1247 = vld [vmem:[#allocation24 + $0x8] sm:$0xff]
    %v1248 = vld [vmem:[#allocation24 + $0x10] sm:$0xff]
    %v1249 = vld [vmem:[#allocation24 + $0x18] sm:$0xff]
    %v1250 = vpack.c.bf16 %v1247, %v1246
    %v1251 = vpack.c.bf16 %v1249, %v1248
    %v1252 = vld [vmem:[#allocation26] sm:$0x1]
    %v1254 = vlaneseq
    %v1255 = vshrl.u32 %v1254, 7
    %v1256 = vsub.s32 0, %v1255
    %v1257 = vrot.slane %v1252, %v1256
    %v1264 = vunpack.c.l.b16 %v1241
    %v1265 = vunpack.c.l.b16 %v1242
    %v1266 = vunpack.c.l.b16 %v1243
    %v1267 = vunpack.c.l.b16 %v1244
    %v1268 = vunpack.c.l.b16 %v1245
    %vm1269 = vcmask 1041409
    %v1270 = vsel %vm1269, %v1265, %v1264
    %vm1271 = vcmask 1042434
    %v1272 = vsel %vm1271, %v1266, %v1270
    %vm1273 = vcmask 1043459
    %v1274 = vsel %vm1273, %v1267, %v1272
    %vm1275 = vcmask 1044484
    %v1276 = vsel %vm1275, %v1268, %v1274
    %v1277 = vpack.c.b16 %v1276, %v1276
    %v1279 = vsel %vm488, %v1277, 0
    %1281 = vmatprep.subr.bf16.mxu0 0
    %1282 = vmatpush1.bf16.msra.mxu0 %v1250
    %1283 = vmatprep.subr.bf16.mxu0 0
    %1284 = vmatpush1.bf16.msra.mxu0 %v1251
    %1285 = vmatprep.subr.bf16.mxu0 0
    %1286 = vmatpush1.bf16.msra.mxu0 0
    %1287 = vmatprep.subr.bf16.mxu0 0
    %1288 = vmatpush1.bf16.msra.mxu0 0
    %1289 = vmatprep.subr.bf16.mxu0 0
    %1290 = vmatpush1.bf16.msra.mxu0 0
    %1291 = vmatprep.subr.bf16.mxu0 0
    %1292 = vmatpush1.bf16.msra.mxu0 0
    %1293 = vmatprep.subr.bf16.mxu0 0
    %1294 = vmatpush1.bf16.msra.mxu0 0
    %1295 = vmatprep.subr.bf16.mxu0 0
    %1296 = vmatpush1.bf16.msra.mxu0 0
    %1297 = vmatprep.subr.bf16.mxu0 0
    %1298 = vmatpush1.bf16.msra.mxu0 0
    %1299 = vmatprep.subr.bf16.mxu0 0
    %1300 = vmatpush1.bf16.msra.mxu0 0
    %1301 = vmatprep.subr.bf16.mxu0 0
    %1302 = vmatpush1.bf16.msra.mxu0 0
    %1303 = vmatprep.subr.bf16.mxu0 0
    %1304 = vmatpush1.bf16.msra.mxu0 0
    %1305 = vmatprep.subr.bf16.mxu0 0
    %1306 = vmatpush1.bf16.msra.mxu0 0
    %1307 = vmatprep.subr.bf16.mxu0 0
    %1308 = vmatpush1.bf16.msra.mxu0 0
    %1309 = vmatprep.subr.bf16.mxu0 0
    %1310 = vmatpush1.bf16.msra.mxu0 0
    %1311 = vmatprep.subr.bf16.mxu0 0
    %1312 = vmatpush1.bf16.msra.mxu0 0
    %1313 = vmatprep.mubr.bf16.mxu0 0
    %1314 = vmatmul.mubr.bf16.gmra.mrb[0].mxu0 %v1279
    %v1315 = vpop.f32.mrb[0].mxu0
    %v1316 = vadd.f32 %v1257, %v1315
    %v1317 = vpop.f32.mrb[0].mxu0
    %v1318 = vpop.f32.mrb[0].mxu0
    %v1319 = vpop.f32.mrb[0].mxu0
    %1320 = vdwg.mxu0
    %v1321 = vmax.f32 %v1316, 0.0
    %v1322 = vld [vmem:[#allocation21] sm:$0x1]
    %v1324 = vlaneseq
    %v1325 = vshrl.u32 %v1324, 7
    %v1326 = vsub.s32 0, %v1325
    %v1327 = vrot.slane %v1322, %v1326
    %v1329 = vmul.f32 %v1321, %v1327
    %vm1330 = vcmask 258048
    %v1331 = vsel %vm1330, %v1329, 0.0
    %1332 = vadd.xlane.f32.xlu0 %v1331
    %v1333 = vpop.xlane.xlu0 %1332
    %v1334 = vpack.c.bf16 %v1202, %v1201
    %v1335 = vpack.c.bf16 %v1204, %v1203
    %v1336 = vpack.c.bf16 %v1205, %v1205
    %v1337 = vld [vmem:[#allocation27] sm:$0xff]
    %v1338 = vld [vmem:[#allocation27 + $0x8] sm:$0xff]
    %v1339 = vld [vmem:[#allocation27 + $0x10] sm:$0xff]
    %v1340 = vld [vmem:[#allocation27 + $0x18] sm:$0xff]
    %v1341 = vpack.c.bf16 %v1338, %v1337
    %v1342 = vpack.c.bf16 %v1340, %v1339
    %v1343 = vld [vmem:[#allocation29] sm:$0x1]
    %v1345 = vlaneseq
    %v1346 = vshrl.u32 %v1345, 7
    %v1347 = vsub.s32 0, %v1346
    %v1348 = vrot.slane %v1343, %v1347
    %v1351 = vsel %vm488, %v1334, 0
    %v1354 = vsel %vm488, %v1335, 0
    %v1357 = vsel %vm488, %v1336, 0
    %1359 = vmatprep.subr.bf16.mxu0 0
    %1360 = vmatpush1.bf16.msra.mxu0 %v1341
    %1361 = vmatprep.subr.bf16.mxu0 0
    %1362 = vmatpush1.bf16.msra.mxu0 %v1342
    %1363 = vmatprep.subr.bf16.mxu0 0
    %1364 = vmatpush1.bf16.msra.mxu0 0
    %1365 = vmatprep.subr.bf16.mxu0 0
    %1366 = vmatpush1.bf16.msra.mxu0 0
    %1367 = vmatprep.subr.bf16.mxu0 0
    %1368 = vmatpush1.bf16.msra.mxu0 0
    %1369 = vmatprep.subr.bf16.mxu0 0
    %1370 = vmatpush1.bf16.msra.mxu0 0
    %1371 = vmatprep.subr.bf16.mxu0 0
    %1372 = vmatpush1.bf16.msra.mxu0 0
    %1373 = vmatprep.subr.bf16.mxu0 0
    %1374 = vmatpush1.bf16.msra.mxu0 0
    %1375 = vmatprep.subr.bf16.mxu0 0
    %1376 = vmatpush1.bf16.msra.mxu0 0
    %1377 = vmatprep.subr.bf16.mxu0 0
    %1378 = vmatpush1.bf16.msra.mxu0 0
    %1379 = vmatprep.subr.bf16.mxu0 0
    %1380 = vmatpush1.bf16.msra.mxu0 0
    %1381 = vmatprep.subr.bf16.mxu0 0
    %1382 = vmatpush1.bf16.msra.mxu0 0
    %1383 = vmatprep.subr.bf16.mxu0 0
    %1384 = vmatpush1.bf16.msra.mxu0 0
    %1385 = vmatprep.subr.bf16.mxu0 0
    %1386 = vmatpush1.bf16.msra.mxu0 0
    %1387 = vmatprep.subr.bf16.mxu0 0
    %1388 = vmatpush1.bf16.msra.mxu0 0
    %1389 = vmatprep.subr.bf16.mxu0 0
    %1390 = vmatpush1.bf16.msra.mxu0 0
    %1391 = vmatprep.mubr.bf16.mxu0 0
    %1392 = vmatmul.mubr.bf16.gmra.mrb[0].mxu0 %v1351
    %v1393 = vpop.f32.mrb[0].mxu0
    %v1394 = vadd.f32 %v1348, %v1393
    %v1395 = vpop.f32.mrb[0].mxu0
    %v1396 = vpop.f32.mrb[0].mxu0
    %v1397 = vadd.f32 %v1348, %v1396
    %v1398 = vpop.f32.mrb[0].mxu0
    %1399 = vmatprep.mubr.bf16.mxu0 0
    %1400 = vmatmul.mubr.bf16.gmra.mrb[0].mxu0 %v1354
    %v1401 = vpop.f32.mrb[0].mxu0
    %v1402 = vadd.f32 %v1348, %v1401
    %v1403 = vpop.f32.mrb[0].mxu0
    %v1404 = vpop.f32.mrb[0].mxu0
    %v1405 = vadd.f32 %v1348, %v1404
    %v1406 = vpop.f32.mrb[0].mxu0
    %1407 = vmatprep.mubr.bf16.mxu0 0
    %1408 = vmatmul.mubr.bf16.gmra.mrb[0].mxu0 %v1357
    %v1409 = vpop.f32.mrb[0].mxu0
    %v1410 = vadd.f32 %v1348, %v1409
    %v1411 = vpop.f32.mrb[0].mxu0
    %v1412 = vpop.f32.mrb[0].mxu0
    %v1413 = vpop.f32.mrb[0].mxu0
    %1414 = vdwg.mxu0
    %v1415 = vmax.f32 %v1394, 0.0
    %v1416 = vmax.f32 %v1397, 0.0
    %v1417 = vmax.f32 %v1402, 0.0
    %v1418 = vmax.f32 %v1405, 0.0
    %v1419 = vmax.f32 %v1410, 0.0
    %v1420 = vld [vmem:[#allocation23] sm:$0x1]
    %v1422 = vlaneseq
    %v1423 = vshrl.u32 %v1422, 7
    %v1424 = vsub.s32 0, %v1423
    %v1425 = vrot.slane %v1420, %v1424
    %v1427 = vmul.f32 %v1415, %v1425
    %v1428 = vmul.f32 %v1416, %v1425
    %v1429 = vmul.f32 %v1417, %v1425
    %v1430 = vmul.f32 %v1418, %v1425
    %v1431 = vmul.f32 %v1419, %v1425
    %v1432 = vsel %vm488, %v1427, 0.0
    %1433 = vadd.xlane.f32.xlu0 %v1432
    %v1434 = vpop.xlane.xlu0 %1433
    %v1435 = vsel %vm488, %v1428, 0.0
    %1436 = vadd.xlane.f32.xlu0 %v1435
    %v1437 = vpop.xlane.xlu0 %1436
    %v1438 = vsel %vm488, %v1429, 0.0
    %1439 = vadd.xlane.f32.xlu0 %v1438
    %v1440 = vpop.xlane.xlu0 %1439
    %v1441 = vsel %vm488, %v1430, 0.0
    %1442 = vadd.xlane.f32.xlu0 %v1441
    %v1443 = vpop.xlane.xlu0 %1442
    %v1444 = vsel %vm488, %v1431, 0.0
    %1445 = vadd.xlane.f32.xlu0 %v1444
    %v1446 = vpop.xlane.xlu0 %1445
    %v1448 = vlaneseq
    %v1449 = vshrl.u32 %v1448, 7
    %v1450 = vsub.s32 0, %v1449
    %v1451 = vrot.slane %v1333, %v1450
    %v1452 = vlaneseq
    %v1453 = vshrl.u32 %v1452, 7
    %v1454 = vsub.s32 1, %v1453
    %v1455 = vrot.slane %v1333, %v1454
    %v1456 = vlaneseq
    %v1457 = vshrl.u32 %v1456, 7
    %v1458 = vsub.s32 2, %v1457
    %v1459 = vrot.slane %v1333, %v1458
    %v1460 = vlaneseq
    %v1461 = vshrl.u32 %v1460, 7
    %v1462 = vsub.s32 3, %v1461
    %v1463 = vrot.slane %v1333, %v1462
    %v1464 = vlaneseq
    %v1465 = vshrl.u32 %v1464, 7
    %v1466 = vsub.s32 4, %v1465
    %v1467 = vrot.slane %v1333, %v1466
    %v1473 = vadd.f32 %v1434, %v1451
    %v1474 = vadd.f32 %v1437, %v1455
    %v1475 = vadd.f32 %v1440, %v1459
    %v1476 = vadd.f32 %v1443, %v1463
    %v1477 = vadd.f32 %v1446, %v1467
    %v1478 = vld [vmem:[#allocation2] sm:$0x1]
    %v1480 = vlaneseq
    %v1481 = vshrl.u32 %v1480, 7
    %v1482 = vsub.s32 0, %v1481
    %v1483 = vrot.slane %v1478, %v1482
    %1484 = vset.pattern.permute.xlu0 0
    %1485 = vperm.xlu0 %1484, %v1483
    %v1486 = vpop.permute.xlu0 %1485
    %v1488 = vadd.f32 %v1473, %v1486
    %v1489 = vadd.f32 %v1474, %v1486
    %v1490 = vadd.f32 %v1475, %v1486
    %v1491 = vadd.f32 %v1476, %v1486
    %v1492 = vadd.f32 %v1477, %v1486
    %v1493 = vld [vmem:[#allocation8] sm:$0x1f]
    %vm1494 = vcmp.ne.f32.partialorder %v1493, 0.0
    %1500 = vset.pattern.permute.xlu0 0
    %1501 = vperm.xlu0 %1500, %v1488
    %v1502 = vpop.permute.xlu0 %1501
    %1503 = vset.pattern.permute.xlu0 0
    %1504 = vperm.xlu0 %1503, %v1489
    %v1505 = vpop.permute.xlu0 %1504
    %1506 = vset.pattern.permute.xlu0 0
    %1507 = vperm.xlu0 %1506, %v1490
    %v1508 = vpop.permute.xlu0 %1507
    %1509 = vset.pattern.permute.xlu0 0
    %1510 = vperm.xlu0 %1509, %v1491
    %v1511 = vpop.permute.xlu0 %1510
    %1512 = vset.pattern.permute.xlu0 0
    %1513 = vperm.xlu0 %1512, %v1492
    %v1514 = vpop.permute.xlu0 %1513
    %v1515 = vlaneseq
    %v1516 = vand.u32 %v1515, 127
    %v1517 = vlaneseq
    %v1518 = vshrl.u32 %v1517, 7
    %v1519 = vsub.s32 %v1516, %v1518
    %v1520 = vrot.slane %v1502, %v1519
    %v1521 = vlaneseq
    %v1522 = vshrl.u32 %v1521, 7
    %v1523 = vsub.s32 %v1516, %v1522
    %v1524 = vrot.slane %v1505, %v1523
    %v1525 = vlaneseq
    %v1526 = vshrl.u32 %v1525, 7
    %v1527 = vsub.s32 %v1516, %v1526
    %v1528 = vrot.slane %v1508, %v1527
    %v1529 = vlaneseq
    %v1530 = vshrl.u32 %v1529, 7
    %v1531 = vsub.s32 %v1516, %v1530
    %v1532 = vrot.slane %v1511, %v1531
    %v1533 = vlaneseq
    %v1534 = vshrl.u32 %v1533, 7
    %v1535 = vsub.s32 %v1516, %v1534
    %v1536 = vrot.slane %v1514, %v1535
    %v1537 = vsel %vm1269, %v1524, %v1520
    %v1538 = vsel %vm1271, %v1528, %v1537
    %v1539 = vsel %vm1273, %v1532, %v1538
    %v1540 = vsel %vm1275, %v1536, %v1539
    %v1542 = vsel %vm1494, %v1540, -1e+20
    %vm1543 = vcmask 61440
    %1544 = vst.msk [vmem:[#allocation30] sm:$0x1f] %vm1543, %v1542
    %v1545 = vsel %vm1543, %v1542, -inf
    %1546 = vmax.xlane.f32.xlu0 %v1545
    %v1547 = vpop.xlane.xlu0 %1546
    %v1548 = vsub.f32 %v1542, %v1547
    %v1549 = vmul.f32 %v1548, 1.442695
    %v1550 = vpow.pop %v1549
    %v1551 = vsel %vm1543, %v1550, 0.0
    %1552 = vadd.xlane.f32.xlu0 %v1551
    %v1553 = vpop.xlane.xlu0 %1552
    %v1554 = vlog2.pop %v1553
    %v1555 = vmul.f32 %v1554, 0.6931472
    %v1556 = vadd.f32 %v1547, %v1555
    %v1557 = vsub.f32 %v1542, %v1556
    %1558 = vst.msk [vmem:[#allocation31] sm:$0x1f] %vm1543, %v1557
    // Predicated region
    $region142: #{tpu_custom_call.1} parent=1 // pred_check
      _
    $region143: #{tpu_custom_call.1} parent=1 // pred_check_branch
      %1560 = sbr.rel (0) target = $region145
    $region144: #{tpu_custom_call.1} parent=1 // pred_region
      %s1562 = ssub.s32 128, 128
      %1563 = vsyncadd [#allocation5], %s1562
      %s1565 = sshll.u32 [#allocation30], 4
      %s1566 = int_to_ptr.vmem [resolvable:$true] %s1565
      %1568 = dma.vmem_to_hbm [thread:$0]  %s1566, 128, %s18, [#allocation5]
    $region145: #{tpu_custom_call.1} parent=1 // pred_fallthru
      _
    // Predicated region
    $region146: #{tpu_custom_call.1} parent=1 // pred_check
      _
    $region147: #{tpu_custom_call.1} parent=1 // pred_check_branch
      %1570 = sbr.rel (0) target = $region149
    $region148: #{tpu_custom_call.1} parent=1 // pred_region
      %s1572 = ssub.s32 128, 128
      %1573 = vsyncadd [#allocation32], %s1572
      %s1575 = sshll.u32 [#allocation31], 4
      %s1576 = int_to_ptr.vmem [resolvable:$true] %s1575
      %1578 = dma.vmem_to_hbm [thread:$0]  %s1576, 128, %s19, [#allocation32]
    $region149: #{tpu_custom_call.1} parent=1 // pred_fallthru
      _
    // Predicated region
    $region150: #{tpu_custom_call.1} parent=1 // pred_check
      _
    $region151: #{tpu_custom_call.1} parent=1 // pred_check_branch
      %1580 = sbr.rel (0) target = $region153
    $region152: #{tpu_custom_call.1} parent=1 // pred_region
      %1581 = dma.done [#allocation5], 128
    $region153: #{tpu_custom_call.1} parent=1 // pred_fallthru
      _
    // Predicated region
    $region154: #{tpu_custom_call.1} parent=1 // pred_check
      _
    $region155: #{tpu_custom_call.1} parent=1 // pred_check_branch
      %1583 = sbr.rel (0) target = $region157
    $region156: #{tpu_custom_call.1} parent=1 // pred_region
      %1584 = dma.done [#allocation32], 128
    $region157: #{tpu_custom_call.1} parent=1 // pred_fallthru
      _
    %1585 = vsyncpa [#allocation4], 1
    %1586 = vsyncpa [#allocation7], 1
    %1587 = vsyncpa [#allocation10], 1
    %1588 = vsyncpa [#allocation13], 1
    %1589 = vsyncpa [#allocation16], 1
    %1590 = vsyncpa [#allocation19], 1
    %1591 = vsyncpa [#allocation22], 1
    %1592 = vsyncpa [#allocation25], 1
    %1593 = vsyncpa [#allocation28], 1
    %1594 = vsyncpa [#allocation5], 1
    %1595 = vsyncpa [#allocation32], 1

</llo_original>
